<compile_context>
chip_gen: v7x
topology: tpu7x:2x2x1
jax: 0.10.0
libtpu: 0.0.40
codegen_flags: <defaults>
</compile_context>

<pallas_src>
import functools

import jax
import jax.numpy as jnp
from jax.experimental import pallas as pl
from jax.experimental.pallas import tpu as pltpu

_NEG = -1e30
_LANE = 128
_ATT_PAD = 8      # att-score segments in w_ext padded to this many columns per side


# ----------------------------------------------------------------------------
# Fused Pallas kernel: all GATConv layers + final log_softmax
# ----------------------------------------------------------------------------
def _make_fused_gat_kernel(cfgs):
    """cfgs: tuple of (heads, oc, concat) per layer (static)."""

    def _gat_layer(x, w_ext, bias, adjb_t, head_mask, heads, oc, concat):
        hc = heads * oc
        n = x.shape[0]

        # Single MXU pass: [h | a_src | a_dst] = x @ [W | W@att_src | W@att_dst]
        hfull = jnp.dot(x, w_ext, preferred_element_type=jnp.float32)   # (N, hc + 2*_ATT_PAD)
        h = hfull[:, :hc]                                               # (N, hc)
        att_t = hfull[:, hc:hc + 2 * _ATT_PAD].T                        # (2*_ATT_PAD, N)
        a_s = att_t[:heads]                                             # (heads, N) source scores
        a_d = att_t[_ATT_PAD:_ATT_PAD + heads]                          # (heads, N) dest scores

        # e[h, j, i] = leaky_relu(a_s[h, j] + a_d[h, i]) + adj_bias_T[j, i]
        raw = a_s[:, :, None] + a_d[:, None, :]                         # (heads, N_src, N_dst)
        e = jnp.maximum(raw, 0.2 * raw) + adjb_t                        # additive -1e30 mask

        # softmax over incoming edges (source axis = 1); masked entries -> exp 0
        e = e - jnp.max(e, axis=1, keepdims=True)
        p = jnp.exp(e)
        p = p * pl.reciprocal(jnp.sum(p, axis=1, keepdims=True), approx=True)
        # TODO(synk): attention dropout (p=0.6) skipped — eval-mode semantics.

        if concat:
            # One K = heads*N matmul; head_mask keeps head h inside its own
            # output column slab, so summing over (h, j) lands directly in the
            # concatenated (N, heads*oc) layout.
            hm2 = (h[None, :, :] * head_mask[:, None, :]).reshape(heads * n, hc)
            p2t = p.reshape(heads * n, n).T                             # (N_dst, heads*N_src)
            out = jnp.dot(p2t.astype(jnp.bfloat16), hm2.astype(jnp.bfloat16),
                          preferred_element_type=jnp.float32)           # (N_dst, hc)
        else:
            # mean over heads (heads == 1 in this model -> a single matmul)
            acc = None
            for hh in range(heads):
                t = jnp.dot(p[hh].T.astype(jnp.bfloat16),
                            h[:, hh * oc:(hh + 1) * oc].astype(jnp.bfloat16),
                            preferred_element_type=jnp.float32)         # (N_dst, oc)
                acc = t if acc is None else acc + t
            out = acc if heads == 1 else acc * (1.0 / float(heads))

        return out + bias

    def kernel(x_ref, adjb_ref, hmask_ref, *rest):
        o_ref = rest[-1]
        p_refs = rest[:-1]

        adjb_t = adjb_ref[...]            # (N_src, N_dst) additive bias, hoisted
        head_mask = hmask_ref[...]        # (heads, heads*oc) for the concat layers
        x = x_ref[...]

        for li, (heads, oc, concat) in enumerate(cfgs):
            w_ext = p_refs[2 * li][...]
            bias = p_refs[2 * li + 1][...]
            x = _gat_layer(x, w_ext, bias, adjb_t, head_mask, heads, oc, concat)

        # F.log_softmax(x, dim=-1); padded class columns carry a -1e30 bias and
        # therefore contribute exactly 0 probability mass.
        x = x - jnp.max(x, axis=-1, keepdims=True)
        x = x - jnp.log(jnp.sum(jnp.exp(x), axis=-1, keepdims=True))
        o_ref[...] = x.astype(o_ref.dtype)

    return kernel


# ----------------------------------------------------------------------------
# Jitted wrapper: adjacency build + fused pallas_call + class slice
# ----------------------------------------------------------------------------
def edge_index_to_bias_t(edge_index, n):
    """Additive mask in (src, dst) layout: 0 where edge j->i (incl. self loops), else -1e30."""
    src = edge_index[0]
    dst = edge_index[1]
    m = jnp.zeros((n, n), jnp.float32).at[src, dst].set(1.0)
    m = jnp.maximum(m, jnp.eye(n, dtype=jnp.float32))
    return jnp.where(m > 0.0, 0.0, _NEG)


@functools.partial(jax.jit, static_argnames=("cfgs", "n_classes"))
def gat_forward(features, edge_index, flat_params, head_mask, *, cfgs, n_classes):
    n = features.shape[0]
    adjb_t = edge_index_to_bias_t(edge_index, n)

    inputs = [features, adjb_t, head_mask]
    for w_ext, bias in flat_params:
        inputs += [w_ext, bias]
    out_dim = flat_params[-1][1].shape[1]          # lane-padded class width

    kernel = _make_fused_gat_kernel(cfgs)
    out = pl.pallas_call(
        kernel,
        out_shape=jax.ShapeDtypeStruct((n, out_dim), jnp.float32),
        in_specs=[pl.BlockSpec(memory_space=pltpu.MemorySpace.VMEM) for _ in inputs],
        out_specs=pl.BlockSpec(memory_space=pltpu.MemorySpace.VMEM),
    )(*inputs)
    return out[:, :n_classes]


# ----------------------------------------------------------------------------
# Parameter construction (host-side glue, mirrors GAT.__init__)
# ----------------------------------------------------------------------------
def _glorot(key, shape):
    fan_in, fan_out = shape[0], shape[-1]
    lim = jnp.sqrt(6.0 / (fan_in + fan_out))
    return jax.random.uniform(key, shape, jnp.float32, minval=-lim, maxval=lim)


def init_gat_params(key, in_feats, n_classes, n_layers):
    """GATConv(in,8,heads=8), middles GATConv(64,8,heads=8),
    last GATConv(64,n_classes,heads=1,concat=False). The per-head attention
    projections are folded into the weight matmul (w_ext = [W | W@a_src | W@a_dst]);
    the last layer's class dim is zero-padded to a full 128-lane slab."""
    layer_defs = [(in_feats, 8, 8, True)]
    for _ in range(n_layers - 2):
        layer_defs.append((8 * 8, 8, 8, True))
    layer_defs.append((8 * 8, n_classes, 1, False))

    flat_params = []
    cfgs = []
    head_mask = None
    for li, (f_in, oc, heads, concat) in enumerate(layer_defs):
        key, k_w, k_s, k_d = jax.random.split(key, 4)
        is_last = li == len(layer_defs) - 1
        assert heads <= _ATT_PAD

        w = _glorot(k_w, (f_in, heads * oc))
        att_src = _glorot(k_s, (heads, oc))
        att_dst = _glorot(k_d, (heads, oc))

        # Fold attention projections into the feature matmul:
        # (x @ w_asrc)[n, h] == sum_c (x @ W)[n, h*oc + c] * att_src[h, c]
        w3 = w.reshape(f_in, heads, oc)
        w_asrc = jnp.einsum("fho,ho->fh", w3, att_src)   # (f_in, heads)
        w_adst = jnp.einsum("fho,ho->fh", w3, att_dst)
        w_asrc = jnp.pad(w_asrc, ((0, 0), (0, _ATT_PAD - heads)))
        w_adst = jnp.pad(w_adst, ((0, 0), (0, _ATT_PAD - heads)))

        out_dim = heads * oc if concat else oc
        bias = jnp.zeros((1, out_dim), jnp.float32)

        if is_last:
            # Lane-dense final output: zero weight columns, -1e30 bias in the
            # padded class columns so log_softmax assigns them exactly 0 mass.
            assert heads == 1 and not concat
            oc_pad = -(-oc // _LANE) * _LANE
            w = jnp.pad(w, ((0, 0), (0, oc_pad - oc)))
            bias = jnp.concatenate(
                [bias, jnp.full((1, oc_pad - oc), _NEG, jnp.float32)], axis=1)
            oc = oc_pad

        w_ext = jnp.concatenate([w, w_asrc, w_adst], axis=1)
        flat_params.append((w_ext, bias))
        cfgs.append((heads, oc, concat))

        if concat:
            hc = heads * oc
            m = (jnp.arange(hc)[None, :] // oc
                 == jnp.arange(heads)[:, None]).astype(jnp.float32)     # (heads, hc)
            if head_mask is None:
                head_mask = m
            else:
                assert head_mask.shape == m.shape, "concat layers must share (heads, oc)"

    if head_mask is None:
        head_mask = jnp.ones((1, 1), jnp.float32)
    return tuple(flat_params), tuple(cfgs), head_mask


# ----------------------------------------------------------------------------
# Main
# ----------------------------------------------------------------------------
if __name__ == "__main__":
    N = 32          # nodes
    IN_FEATS = 16
    N_CLASSES = 4
    N_LAYERS = 3    # GATConv(16,8,h=8), GATConv(64,8,h=8), GATConv(64,4,h=1,concat=False)

    key = jax.random.PRNGKey(0)
    k_feat, k_param = jax.random.split(key)

    features = jax.random.normal(k_feat, (N, IN_FEATS), jnp.float32)

    # deterministic small graph: bidirectional ring
    nodes = jnp.arange(N, dtype=jnp.int32)
    nxt = (nodes + 1) % N
    src = jnp.concatenate([nodes, nxt])
    dst = jnp.concatenate([nxt, nodes])
    edge_index = jnp.stack([src, dst], axis=0)   # (2, 2N)

    flat_params, cfgs, head_mask = init_gat_params(k_param, IN_FEATS, N_CLASSES, N_LAYERS)

    out = gat_forward(features, edge_index, flat_params, head_mask,
                      cfgs=cfgs, n_classes=N_CLASSES)
    out = jax.block_until_ready(out)

    assert out.shape == (N, N_CLASSES)
    # rows of log_softmax should exp-sum to ~1 (padded classes carry ~0 mass)
    row_sums = jnp.exp(out).sum(axis=-1)
    assert bool(jnp.all(jnp.abs(row_sums - 1.0) < 1e-3))
    assert bool(jnp.all(jnp.isfinite(out)))

    print("KERNEL_OK")
</pallas_src>

<mosaic_0001>
module attributes {stable_mosaic.version = 11 : i64} {
  func.func @kernel(%arg0: memref<32x16xf32, #tpu.memory_space<vmem>>, %arg1: memref<32x32xf32, #tpu.memory_space<vmem>>, %arg2: memref<8x64xf32, #tpu.memory_space<vmem>>, %arg3: memref<16x80xf32, #tpu.memory_space<vmem>>, %arg4: memref<1x64xf32, #tpu.memory_space<vmem>>, %arg5: memref<64x80xf32, #tpu.memory_space<vmem>>, %arg6: memref<1x64xf32, #tpu.memory_space<vmem>>, %arg7: memref<64x144xf32, #tpu.memory_space<vmem>>, %arg8: memref<1x128xf32, #tpu.memory_space<vmem>>, %arg9: memref<32x128xf32, #tpu.memory_space<vmem>>) attributes {dimension_semantics = [], scalar_prefetch = 0 : i64, scratch_operands = 0 : i64, tpu.core_type = #tpu.core_type<tc>} {
    %c0 = arith.constant 0 : index
    %c0_0 = arith.constant 0 : index
    %0 = vector.load %arg1[%c0, %c0_0] : memref<32x32xf32, #tpu.memory_space<vmem>>, vector<32x32xf32>
    %1 = vector.shape_cast %0 : vector<32x32xf32> to vector<32x32xf32>
    %c0_1 = arith.constant 0 : index
    %c0_2 = arith.constant 0 : index
    %2 = vector.load %arg2[%c0_1, %c0_2] : memref<8x64xf32, #tpu.memory_space<vmem>>, vector<8x64xf32>
    %c0_3 = arith.constant 0 : index
    %c0_4 = arith.constant 0 : index
    %3 = vector.load %arg0[%c0_3, %c0_4] : memref<32x16xf32, #tpu.memory_space<vmem>>, vector<32x16xf32>
    %c0_5 = arith.constant 0 : index
    %c0_6 = arith.constant 0 : index
    %4 = vector.load %arg3[%c0_5, %c0_6] : memref<16x80xf32, #tpu.memory_space<vmem>>, vector<16x80xf32>
    %c0_7 = arith.constant 0 : index
    %c0_8 = arith.constant 0 : index
    %5 = vector.load %arg4[%c0_7, %c0_8] : memref<1x64xf32, #tpu.memory_space<vmem>>, vector<1x64xf32>
    %cst = arith.constant dense<0.000000e+00> : vector<32x80xf32>
    %6 = tpu.matmul %3, %4, %cst {dimension_numbers = #tpu.dot_dimension_numbers<[1], [0], [0], [1], [0, 0, 1, 1], [], []>} : vector<32x16xf32>, vector<16x80xf32>, vector<32x80xf32> -> vector<32x80xf32>
    %7 = vector.extract_strided_slice %6 {offsets = [0, 0], sizes = [32, 64], strides = [1, 1]} : vector<32x80xf32> to vector<32x64xf32>
    %8 = vector.extract_strided_slice %6 {offsets = [0, 64], sizes = [32, 16], strides = [1, 1]} : vector<32x80xf32> to vector<32x16xf32>
    %9 = tpu.transpose %8, [1, 0] : vector<32x16xf32> -> vector<16x32xf32>
    %10 = vector.extract_strided_slice %9 {offsets = [0, 0], sizes = [8, 32], strides = [1, 1]} : vector<16x32xf32> to vector<8x32xf32>
    %11 = vector.extract_strided_slice %9 {offsets = [8, 0], sizes = [8, 32], strides = [1, 1]} : vector<16x32xf32> to vector<8x32xf32>
    %12 = vector.shape_cast %10 : vector<8x32xf32> to vector<8x32x1xf32>
    %13 = vector.shape_cast %11 : vector<8x32xf32> to vector<8x1x32xf32>
    %14 = vector.broadcast %12 : vector<8x32x1xf32> to vector<8x32x32xf32>
    %15 = vector.broadcast %13 : vector<8x1x32xf32> to vector<8x32x32xf32>
    %16 = arith.addf %14, %15 : vector<8x32x32xf32>
    %cst_9 = arith.constant 2.000000e-01 : f32
    %17 = vector.broadcast %cst_9 : f32 to vector<8x32x32xf32>
    %18 = arith.mulf %17, %16 : vector<8x32x32xf32>
    %19 = arith.maximumf %16, %18 : vector<8x32x32xf32>
    %20 = vector.shape_cast %1 : vector<32x32xf32> to vector<1x32x32xf32>
    %21 = vector.broadcast %20 : vector<1x32x32xf32> to vector<8x32x32xf32>
    %22 = arith.addf %19, %21 : vector<8x32x32xf32>
    %cst_10 = arith.constant dense<0xFF800000> : vector<8x32xf32>
    %23 = vector.multi_reduction <maximumf>, %22, %cst_10 [1] : vector<8x32x32xf32> to vector<8x32xf32>
    %24 = vector.shape_cast %23 : vector<8x32xf32> to vector<8x1x32xf32>
    %25 = vector.broadcast %24 : vector<8x1x32xf32> to vector<8x32x32xf32>
    %26 = arith.subf %22, %25 : vector<8x32x32xf32>
    %27 = math.exp %26 : vector<8x32x32xf32>
    %cst_11 = arith.constant dense<0.000000e+00> : vector<8x32xf32>
    %28 = vector.multi_reduction <add>, %27, %cst_11 [1] : vector<8x32x32xf32> to vector<8x32xf32>
    %29 = vector.shape_cast %28 : vector<8x32xf32> to vector<8x1x32xf32>
    %30 = tpu.reciprocal %29 {approx = true} : vector<8x1x32xf32> -> vector<8x1x32xf32>
    %31 = vector.broadcast %30 : vector<8x1x32xf32> to vector<8x32x32xf32>
    %32 = arith.mulf %27, %31 : vector<8x32x32xf32>
    %33 = vector.shape_cast %7 : vector<32x64xf32> to vector<1x32x64xf32>
    %34 = vector.shape_cast %2 : vector<8x64xf32> to vector<8x1x64xf32>
    %35 = vector.broadcast %33 : vector<1x32x64xf32> to vector<8x32x64xf32>
    %36 = vector.broadcast %34 : vector<8x1x64xf32> to vector<8x32x64xf32>
    %37 = arith.mulf %35, %36 : vector<8x32x64xf32>
    %38 = vector.shape_cast %37 : vector<8x32x64xf32> to vector<256x64xf32>
    %39 = vector.shape_cast %32 : vector<8x32x32xf32> to vector<256x32xf32>
    %40 = tpu.transpose %39, [1, 0] : vector<256x32xf32> -> vector<32x256xf32>
    %41 = arith.truncf %40 : vector<32x256xf32> to vector<32x256xbf16>
    %42 = arith.truncf %38 : vector<256x64xf32> to vector<256x64xbf16>
    %cst_12 = arith.constant dense<0.000000e+00> : vector<32x64xf32>
    %43 = tpu.matmul %41, %42, %cst_12 {dimension_numbers = #tpu.dot_dimension_numbers<[1], [0], [0], [1], [0, 0, 1, 1], [], []>} : vector<32x256xbf16>, vector<256x64xbf16>, vector<32x64xf32> -> vector<32x64xf32>
    %44 = vector.broadcast %5 : vector<1x64xf32> to vector<32x64xf32>
    %45 = arith.addf %43, %44 : vector<32x64xf32>
    %c0_13 = arith.constant 0 : index
    %c0_14 = arith.constant 0 : index
    %46 = vector.load %arg5[%c0_13, %c0_14] : memref<64x80xf32, #tpu.memory_space<vmem>>, vector<64x80xf32>
    %c0_15 = arith.constant 0 : index
    %c0_16 = arith.constant 0 : index
    %47 = vector.load %arg6[%c0_15, %c0_16] : memref<1x64xf32, #tpu.memory_space<vmem>>, vector<1x64xf32>
    %cst_17 = arith.constant dense<0.000000e+00> : vector<32x80xf32>
    %48 = tpu.matmul %45, %46, %cst_17 {dimension_numbers = #tpu.dot_dimension_numbers<[1], [0], [0], [1], [0, 0, 1, 1], [], []>} : vector<32x64xf32>, vector<64x80xf32>, vector<32x80xf32> -> vector<32x80xf32>
    %49 = vector.extract_strided_slice %48 {offsets = [0, 0], sizes = [32, 64], strides = [1, 1]} : vector<32x80xf32> to vector<32x64xf32>
    %50 = vector.extract_strided_slice %48 {offsets = [0, 64], sizes = [32, 16], strides = [1, 1]} : vector<32x80xf32> to vector<32x16xf32>
    %51 = tpu.transpose %50, [1, 0] : vector<32x16xf32> -> vector<16x32xf32>
    %52 = vector.extract_strided_slice %51 {offsets = [0, 0], sizes = [8, 32], strides = [1, 1]} : vector<16x32xf32> to vector<8x32xf32>
    %53 = vector.extract_strided_slice %51 {offsets = [8, 0], sizes = [8, 32], strides = [1, 1]} : vector<16x32xf32> to vector<8x32xf32>
    %54 = vector.shape_cast %52 : vector<8x32xf32> to vector<8x32x1xf32>
    %55 = vector.shape_cast %53 : vector<8x32xf32> to vector<8x1x32xf32>
    %56 = vector.broadcast %54 : vector<8x32x1xf32> to vector<8x32x32xf32>
    %57 = vector.broadcast %55 : vector<8x1x32xf32> to vector<8x32x32xf32>
    %58 = arith.addf %56, %57 : vector<8x32x32xf32>
    %cst_18 = arith.constant 2.000000e-01 : f32
    %59 = vector.broadcast %cst_18 : f32 to vector<8x32x32xf32>
    %60 = arith.mulf %59, %58 : vector<8x32x32xf32>
    %61 = arith.maximumf %58, %60 : vector<8x32x32xf32>
    %62 = vector.shape_cast %1 : vector<32x32xf32> to vector<1x32x32xf32>
    %63 = vector.broadcast %62 : vector<1x32x32xf32> to vector<8x32x32xf32>
    %64 = arith.addf %61, %63 : vector<8x32x32xf32>
    %cst_19 = arith.constant dense<0xFF800000> : vector<8x32xf32>
    %65 = vector.multi_reduction <maximumf>, %64, %cst_19 [1] : vector<8x32x32xf32> to vector<8x32xf32>
    %66 = vector.shape_cast %65 : vector<8x32xf32> to vector<8x1x32xf32>
    %67 = vector.broadcast %66 : vector<8x1x32xf32> to vector<8x32x32xf32>
    %68 = arith.subf %64, %67 : vector<8x32x32xf32>
    %69 = math.exp %68 : vector<8x32x32xf32>
    %cst_20 = arith.constant dense<0.000000e+00> : vector<8x32xf32>
    %70 = vector.multi_reduction <add>, %69, %cst_20 [1] : vector<8x32x32xf32> to vector<8x32xf32>
    %71 = vector.shape_cast %70 : vector<8x32xf32> to vector<8x1x32xf32>
    %72 = tpu.reciprocal %71 {approx = true} : vector<8x1x32xf32> -> vector<8x1x32xf32>
    %73 = vector.broadcast %72 : vector<8x1x32xf32> to vector<8x32x32xf32>
    %74 = arith.mulf %69, %73 : vector<8x32x32xf32>
    %75 = vector.shape_cast %49 : vector<32x64xf32> to vector<1x32x64xf32>
    %76 = vector.shape_cast %2 : vector<8x64xf32> to vector<8x1x64xf32>
    %77 = vector.broadcast %75 : vector<1x32x64xf32> to vector<8x32x64xf32>
    %78 = vector.broadcast %76 : vector<8x1x64xf32> to vector<8x32x64xf32>
    %79 = arith.mulf %77, %78 : vector<8x32x64xf32>
    %80 = vector.shape_cast %79 : vector<8x32x64xf32> to vector<256x64xf32>
    %81 = vector.shape_cast %74 : vector<8x32x32xf32> to vector<256x32xf32>
    %82 = tpu.transpose %81, [1, 0] : vector<256x32xf32> -> vector<32x256xf32>
    %83 = arith.truncf %82 : vector<32x256xf32> to vector<32x256xbf16>
    %84 = arith.truncf %80 : vector<256x64xf32> to vector<256x64xbf16>
    %cst_21 = arith.constant dense<0.000000e+00> : vector<32x64xf32>
    %85 = tpu.matmul %83, %84, %cst_21 {dimension_numbers = #tpu.dot_dimension_numbers<[1], [0], [0], [1], [0, 0, 1, 1], [], []>} : vector<32x256xbf16>, vector<256x64xbf16>, vector<32x64xf32> -> vector<32x64xf32>
    %86 = vector.broadcast %47 : vector<1x64xf32> to vector<32x64xf32>
    %87 = arith.addf %85, %86 : vector<32x64xf32>
    %c0_22 = arith.constant 0 : index
    %c0_23 = arith.constant 0 : index
    %88 = vector.load %arg7[%c0_22, %c0_23] : memref<64x144xf32, #tpu.memory_space<vmem>>, vector<64x144xf32>
    %c0_24 = arith.constant 0 : index
    %c0_25 = arith.constant 0 : index
    %89 = vector.load %arg8[%c0_24, %c0_25] : memref<1x128xf32, #tpu.memory_space<vmem>>, vector<1x128xf32>
    %cst_26 = arith.constant dense<0.000000e+00> : vector<32x144xf32>
    %90 = tpu.matmul %87, %88, %cst_26 {dimension_numbers = #tpu.dot_dimension_numbers<[1], [0], [0], [1], [0, 0, 1, 1], [], []>} : vector<32x64xf32>, vector<64x144xf32>, vector<32x144xf32> -> vector<32x144xf32>
    %91 = vector.extract_strided_slice %90 {offsets = [0, 0], sizes = [32, 128], strides = [1, 1]} : vector<32x144xf32> to vector<32x128xf32>
    %92 = vector.extract_strided_slice %90 {offsets = [0, 128], sizes = [32, 16], strides = [1, 1]} : vector<32x144xf32> to vector<32x16xf32>
    %93 = tpu.transpose %92, [1, 0] : vector<32x16xf32> -> vector<16x32xf32>
    %94 = vector.extract_strided_slice %93 {offsets = [0, 0], sizes = [1, 32], strides = [1, 1]} : vector<16x32xf32> to vector<1x32xf32>
    %95 = vector.extract_strided_slice %93 {offsets = [8, 0], sizes = [1, 32], strides = [1, 1]} : vector<16x32xf32> to vector<1x32xf32>
    %96 = vector.shape_cast %94 : vector<1x32xf32> to vector<1x32x1xf32>
    %97 = vector.shape_cast %95 : vector<1x32xf32> to vector<1x1x32xf32>
    %98 = vector.broadcast %96 : vector<1x32x1xf32> to vector<1x32x32xf32>
    %99 = vector.broadcast %97 : vector<1x1x32xf32> to vector<1x32x32xf32>
    %100 = arith.addf %98, %99 : vector<1x32x32xf32>
    %cst_27 = arith.constant 2.000000e-01 : f32
    %101 = vector.broadcast %cst_27 : f32 to vector<1x32x32xf32>
    %102 = arith.mulf %101, %100 : vector<1x32x32xf32>
    %103 = arith.maximumf %100, %102 : vector<1x32x32xf32>
    %104 = vector.shape_cast %1 : vector<32x32xf32> to vector<1x32x32xf32>
    %105 = arith.addf %103, %104 : vector<1x32x32xf32>
    %cst_28 = arith.constant dense<0xFF800000> : vector<1x32xf32>
    %106 = vector.multi_reduction <maximumf>, %105, %cst_28 [1] : vector<1x32x32xf32> to vector<1x32xf32>
    %107 = vector.shape_cast %106 : vector<1x32xf32> to vector<1x1x32xf32>
    %108 = vector.broadcast %107 : vector<1x1x32xf32> to vector<1x32x32xf32>
    %109 = arith.subf %105, %108 : vector<1x32x32xf32>
    %110 = math.exp %109 : vector<1x32x32xf32>
    %cst_29 = arith.constant dense<0.000000e+00> : vector<1x32xf32>
    %111 = vector.multi_reduction <add>, %110, %cst_29 [1] : vector<1x32x32xf32> to vector<1x32xf32>
    %112 = vector.shape_cast %111 : vector<1x32xf32> to vector<1x1x32xf32>
    %113 = tpu.reciprocal %112 {approx = true} : vector<1x1x32xf32> -> vector<1x1x32xf32>
    %114 = vector.broadcast %113 : vector<1x1x32xf32> to vector<1x32x32xf32>
    %115 = arith.mulf %110, %114 : vector<1x32x32xf32>
    %116 = vector.shape_cast %115 : vector<1x32x32xf32> to vector<32x32xf32>
    %117 = tpu.transpose %116, [1, 0] : vector<32x32xf32> -> vector<32x32xf32>
    %118 = arith.truncf %117 : vector<32x32xf32> to vector<32x32xbf16>
    %119 = arith.truncf %91 : vector<32x128xf32> to vector<32x128xbf16>
    %cst_30 = arith.constant dense<0.000000e+00> : vector<32x128xf32>
    %120 = tpu.matmul %118, %119, %cst_30 {dimension_numbers = #tpu.dot_dimension_numbers<[1], [0], [0], [1], [0, 0, 1, 1], [], []>} : vector<32x32xbf16>, vector<32x128xbf16>, vector<32x128xf32> -> vector<32x128xf32>
    %121 = vector.broadcast %89 : vector<1x128xf32> to vector<32x128xf32>
    %122 = arith.addf %120, %121 : vector<32x128xf32>
    %cst_31 = arith.constant dense<0xFF800000> : vector<32xf32>
    %123 = vector.multi_reduction <maximumf>, %122, %cst_31 [1] : vector<32x128xf32> to vector<32xf32>
    %124 = vector.shape_cast %123 : vector<32xf32> to vector<32x1xf32>
    %125 = vector.broadcast %124 : vector<32x1xf32> to vector<32x128xf32>
    %126 = arith.subf %122, %125 : vector<32x128xf32>
    %127 = math.exp %126 : vector<32x128xf32>
    %cst_32 = arith.constant dense<0.000000e+00> : vector<32xf32>
    %128 = vector.multi_reduction <add>, %127, %cst_32 [1] : vector<32x128xf32> to vector<32xf32>
    %129 = vector.shape_cast %128 : vector<32xf32> to vector<32x1xf32>
    %130 = math.log %129 : vector<32x1xf32>
    %131 = vector.broadcast %130 : vector<32x1xf32> to vector<32x128xf32>
    %132 = arith.subf %126, %131 : vector<32x128xf32>
    %c0_33 = arith.constant 0 : index
    %c0_34 = arith.constant 0 : index
    %133 = vector.load %arg9[%c0_33, %c0_34] : memref<32x128xf32, #tpu.memory_space<vmem>>, vector<32x128xf32>
    tpu.vector_store %arg9[%c0_33, %c0_34], %132 {strides = array<i32>} : memref<32x128xf32, #tpu.memory_space<vmem>>, vector<32x128xf32>,
    return
  }
}

</mosaic_0001>

<llo_original>
// kernel: gat_forward.1
$region0: #{gat_forward.1}
  #allocation0 [shape = 'u32[]', space=smem, size = 0x4, offset = 0x4, fixed_abs, tag = 'smem constant byte address 0x4 - core index']
  #allocation1 [shape = 'u32[144,128]{1,0:T(1,128)}', space=vmem, size = 0x12000, scoped, tag = 'internal scratch']
  %s0 = inlined_call_operand.vmem [shape: f32[32,16], index: 0, kind: input, shape index: {}]
  %s1 = inlined_call_operand.vmem [shape: f32[32,32], index: 1, kind: input, shape index: {}]
  %s2 = inlined_call_operand.vmem [shape: f32[8,64], index: 2, kind: input, shape index: {}]
  %s3 = inlined_call_operand.vmem [shape: f32[16,80], index: 3, kind: input, shape index: {}]
  %s4 = inlined_call_operand.vmem [shape: f32[1,64], index: 4, kind: input, shape index: {}]
  %s5 = inlined_call_operand.vmem [shape: f32[64,80], index: 5, kind: input, shape index: {}]
  %s6 = inlined_call_operand.vmem [shape: f32[1,64], index: 6, kind: input, shape index: {}]
  %s7 = inlined_call_operand.vmem [shape: f32[64,144], index: 7, kind: input, shape index: {}]
  %s8 = inlined_call_operand.vmem [shape: f32[1,128], index: 8, kind: input, shape index: {}]
  %s9 = inlined_call_operand.vmem [shape: f32[32,128], index: 9, kind: output, shape index: {}]
  %s10 = sld [smem:[#allocation0]]
  $region46: #{gat_forward.1} parent=0
    _
  %s12 = ssub.s32 1, %s10
  %s13 = scalar_select 0, %s12, %s10
  // Predicated region
  $region2: #{gat_forward.1} parent=0 // pred_check
    _
  $region3: #{gat_forward.1} parent=0 // pred_check_branch
    %15 = sbr.rel (0) target = $region5
  $region4: #{gat_forward.1} parent=0 // pred_region
    _
  $region5: #{gat_forward.1} parent=0 // pred_fallthru
    _
  // Predicated region
  $region6: #{gat_forward.1} parent=0 // pred_check
    _
  $region7: #{gat_forward.1} parent=0 // pred_check_branch
    %17 = sbr.rel (0) target = $region9
  $region8: #{gat_forward.1} parent=0 // pred_region
    _
  $region9: #{gat_forward.1} parent=0 // pred_fallthru
    _
  // Predicated region
  $region10: #{gat_forward.1} parent=0 // pred_check
    _
  $region11: #{gat_forward.1} parent=0 // pred_check_branch
    %19 = sbr.rel (0) target = $region13
  $region12: #{gat_forward.1} parent=0 // pred_region
    _
  $region13: #{gat_forward.1} parent=0 // pred_fallthru
    _
  // Predicated region
  $region14: #{gat_forward.1} parent=0 // pred_check
    _
  $region15: #{gat_forward.1} parent=0 // pred_check_branch
    %21 = sbr.rel (0) target = $region17
  $region16: #{gat_forward.1} parent=0 // pred_region
    _
  $region17: #{gat_forward.1} parent=0 // pred_fallthru
    _
  // Predicated region
  $region18: #{gat_forward.1} parent=0 // pred_check
    _
  $region19: #{gat_forward.1} parent=0 // pred_check_branch
    %23 = sbr.rel (0) target = $region21
  $region20: #{gat_forward.1} parent=0 // pred_region
    _
  $region21: #{gat_forward.1} parent=0 // pred_fallthru
    _
  // Predicated region
  $region22: #{gat_forward.1} parent=0 // pred_check
    _
  $region23: #{gat_forward.1} parent=0 // pred_check_branch
    %25 = sbr.rel (0) target = $region25
  $region24: #{gat_forward.1} parent=0 // pred_region
    _
  $region25: #{gat_forward.1} parent=0 // pred_fallthru
    _
  // Predicated region
  $region26: #{gat_forward.1} parent=0 // pred_check
    _
  $region27: #{gat_forward.1} parent=0 // pred_check_branch
    %27 = sbr.rel (0) target = $region29
  $region28: #{gat_forward.1} parent=0 // pred_region
    _
  $region29: #{gat_forward.1} parent=0 // pred_fallthru
    _
  // Predicated region
  $region30: #{gat_forward.1} parent=0 // pred_check
    _
  $region31: #{gat_forward.1} parent=0 // pred_check_branch
    %29 = sbr.rel (0) target = $region33
  $region32: #{gat_forward.1} parent=0 // pred_region
    _
  $region33: #{gat_forward.1} parent=0 // pred_fallthru
    _
  // Predicated region
  $region34: #{gat_forward.1} parent=0 // pred_check
    _
  $region35: #{gat_forward.1} parent=0 // pred_check_branch
    %31 = sbr.rel (0) target = $region37
  $region36: #{gat_forward.1} parent=0 // pred_region
    _
  $region37: #{gat_forward.1} parent=0 // pred_fallthru
    _
  %v33 = vld [vmem:[%s1] sm:$0xff]
  %v34 = vld [vmem:[%s1 + $0x8] sm:$0xff]
  %v35 = vld [vmem:[%s1 + $0x10] sm:$0xff]
  %v36 = vld [vmem:[%s1 + $0x18] sm:$0xff]
  %v37 = vld [vmem:[%s2] sm:$0xff]
  %v38 = vld [vmem:[%s0] sm:$0xff]
  %v39 = vld [vmem:[%s0 + $0x8] sm:$0xff]
  %v40 = vld [vmem:[%s0 + $0x10] sm:$0xff]
  %v41 = vld [vmem:[%s0 + $0x18] sm:$0xff]
  %v42 = vld [vmem:[%s3] sm:$0xff]
  %v43 = vld [vmem:[%s3 + $0x8] sm:$0xff]
  %v44 = vld [vmem:[%s4] sm:$0x1]
  %vm45 = vcmask 130048
  %v47 = vsel %vm45, %v38, 0
  %v50 = vsel %vm45, %v39, 0
  %v53 = vsel %vm45, %v40, 0
  %v56 = vsel %vm45, %v41, 0
  %58 = vmatprep.subr.mxu0 0.0
  %59 = vmatpush1.msra.mxu0 %v42
  %60 = vmatprep.subr.mxu0 0.0
  %61 = vmatpush1.msra.mxu0 %v43
  %62 = vmatprep.subr.mxu0 0.0
  %63 = vmatpush1.msra.mxu0 0.0
  %64 = vmatprep.subr.mxu0 0.0
  %65 = vmatpush1.msra.mxu0 0.0
  %66 = vmatprep.subr.mxu0 0.0
  %67 = vmatpush1.msra.mxu0 0.0
  %68 = vmatprep.subr.mxu0 0.0
  %69 = vmatpush1.msra.mxu0 0.0
  %70 = vmatprep.subr.mxu0 0.0
  %71 = vmatpush1.msra.mxu0 0.0
  %72 = vmatprep.subr.mxu0 0.0
  %73 = vmatpush1.msra.mxu0 0.0
  %74 = vmatprep.subr.mxu0 0.0
  %75 = vmatpush1.msra.mxu0 0.0
  %76 = vmatprep.subr.mxu0 0.0
  %77 = vmatpush1.msra.mxu0 0.0
  %78 = vmatprep.subr.mxu0 0.0
  %79 = vmatpush1.msra.mxu0 0.0
  %80 = vmatprep.subr.mxu0 0.0
  %81 = vmatpush1.msra.mxu0 0.0
  %82 = vmatprep.subr.mxu0 0.0
  %83 = vmatpush1.msra.mxu0 0.0
  %84 = vmatprep.subr.mxu0 0.0
  %85 = vmatpush1.msra.mxu0 0.0
  %86 = vmatprep.subr.mxu0 0.0
  %87 = vmatpush1.msra.mxu0 0.0
  %88 = vmatprep.subr.mxu0 0.0
  %89 = vmatpush1.msra.mxu0 0.0
  %90 = vmatprep.subr.mxu0 0.0
  %91 = vmatpush1.msra.mxu0 0.0
  %92 = vmatprep.subr.mxu0 0.0
  %93 = vmatpush1.msra.mxu0 0.0
  %94 = vmatprep.subr.mxu0 0.0
  %95 = vmatpush1.msra.mxu0 0.0
  %96 = vmatprep.subr.mxu0 0.0
  %97 = vmatpush1.msra.mxu0 0.0
  %98 = vmatprep.subr.mxu0 0.0
  %99 = vmatpush1.msra.mxu0 0.0
  %100 = vmatprep.subr.mxu0 0.0
  %101 = vmatpush1.msra.mxu0 0.0
  %102 = vmatprep.subr.mxu0 0.0
  %103 = vmatpush1.msra.mxu0 0.0
  %104 = vmatprep.subr.mxu0 0.0
  %105 = vmatpush1.msra.mxu0 0.0
  %106 = vmatprep.subr.mxu0 0.0
  %107 = vmatpush1.msra.mxu0 0.0
  %108 = vmatprep.subr.mxu0 0.0
  %109 = vmatpush1.msra.mxu0 0.0
  %110 = vmatprep.subr.mxu0 0.0
  %111 = vmatpush1.msra.mxu0 0.0
  %112 = vmatprep.subr.mxu0 0.0
  %113 = vmatpush1.msra.mxu0 0.0
  %114 = vmatprep.subr.mxu0 0.0
  %115 = vmatpush1.msra.mxu0 0.0
  %116 = vmatprep.subr.mxu0 0.0
  %117 = vmatpush1.msra.mxu0 0.0
  %118 = vmatprep.subr.mxu0 0.0
  %119 = vmatpush1.msra.mxu0 0.0
  %120 = vmatprep.subr.mxu0 0.0
  %121 = vmatpush1.msra.mxu0 0.0
  %122 = vmatprep.mubr.f32.mxu0 0.0
  %123 = vmatmul.mubr.f32.gmra.mrb[0].mxu0 %v47
  %v124 = vpop.f32.mrb[0].mxu0
  %v125 = vadd.f32 0.0, %v124
  %v126 = vpop.f32.mrb[0].mxu0
  %127 = vmatprep.mubr.f32.mxu0 0.0
  %128 = vmatmul.mubr.f32.gmra.mrb[0].mxu0 %v50
  %v129 = vpop.f32.mrb[0].mxu0
  %v130 = vadd.f32 0.0, %v129
  %v131 = vpop.f32.mrb[0].mxu0
  %132 = vmatprep.mubr.f32.mxu0 0.0
  %133 = vmatmul.mubr.f32.gmra.mrb[0].mxu0 %v53
  %v134 = vpop.f32.mrb[0].mxu0
  %v135 = vadd.f32 0.0, %v134
  %v136 = vpop.f32.mrb[0].mxu0
  %137 = vmatprep.mubr.f32.mxu0 0.0
  %138 = vmatmul.mubr.f32.gmra.mrb[0].mxu0 %v56
  %v139 = vpop.f32.mrb[0].mxu0
  %v140 = vadd.f32 0.0, %v139
  %v141 = vpop.f32.mrb[0].mxu0
  %142 = vdwg.mxu0
  %147 = vrot.lane.b32.xlu0 %v125, 64
  %v148 = vpop.permute.xlu0 %147
  %149 = vrot.lane.b32.xlu0 %v130, 64
  %v150 = vpop.permute.xlu0 %149
  %151 = vrot.lane.b32.xlu0 %v135, 64
  %v152 = vpop.permute.xlu0 %151
  %153 = vrot.lane.b32.xlu0 %v140, 64
  %v154 = vpop.permute.xlu0 %153
  %159 = vxpose.xlu0.b32.start [1/16] %v148, 128
  %160 = vxpose.xlu0.b32.cont [2/16] %v150, 128
  %161 = vxpose.xlu0.b32.cont [3/16] %v152, 128
  %162 = vxpose.xlu0.b32.cont [4/16] %v154, 128
  %163 = vxpose.xlu0.b32.cont [5/16] 0.0, 128
  %164 = vxpose.xlu0.b32.cont [6/16] 0.0, 128
  %165 = vxpose.xlu0.b32.cont [7/16] 0.0, 128
  %166 = vxpose.xlu0.b32.cont [8/16] 0.0, 128
  %167 = vxpose.xlu0.b32.cont [9/16] 0.0, 128
  %168 = vxpose.xlu0.b32.cont [10/16] 0.0, 128
  %169 = vxpose.xlu0.b32.cont [11/16] 0.0, 128
  %170 = vxpose.xlu0.b32.cont [12/16] 0.0, 128
  %171 = vxpose.xlu0.b32.cont [13/16] 0.0, 128
  %172 = vxpose.xlu0.b32.cont [14/16] 0.0, 128
  %173 = vxpose.xlu0.b32.cont [15/16] 0.0, 128
  %174 = vxpose.xlu0.b32.end [16/16] 0.0, 128
  %v175 = vpop.trf.xlu0
  %v176 = vpop.trf.xlu0
  %v177 = vpop.trf.xlu0
  %v178 = vpop.trf.xlu0
  %v179 = vpop.trf.xlu0
  %v180 = vpop.trf.xlu0
  %v181 = vpop.trf.xlu0
  %v182 = vpop.trf.xlu0
  %v183 = vpop.trf.xlu0
  %v184 = vpop.trf.xlu0
  %v185 = vpop.trf.xlu0
  %v186 = vpop.trf.xlu0
  %v187 = vpop.trf.xlu0
  %v188 = vpop.trf.xlu0
  %v189 = vpop.trf.xlu0
  %v190 = vpop.trf.xlu0
  %v191 = vlaneseq
  %v192 = vshrl.u32 %v191, 7
  %v193 = vsub.s32 0, %v192
  %v194 = vrot.slane %v175, %v193
  %196 = vbcast.lane.b32.xlu0 %v194, 256
  %v197 = vpop.permute.xlu0 %196
  %s199 = sor.u32 256, 8
  %200 = vbcast.lane.b32.xlu0 %v194, %s199
  %v201 = vpop.permute.xlu0 %200
  %s203 = sor.u32 256, 16
  %204 = vbcast.lane.b32.xlu0 %v194, %s203
  %v205 = vpop.permute.xlu0 %204
  %s207 = sor.u32 256, 24
  %208 = vbcast.lane.b32.xlu0 %v194, %s207
  %v209 = vpop.permute.xlu0 %208
  %v210 = vlaneseq
  %v211 = vshrl.u32 %v210, 7
  %v212 = vsub.s32 1, %v211
  %v213 = vrot.slane %v175, %v212
  %215 = vbcast.lane.b32.xlu0 %v213, 256
  %v216 = vpop.permute.xlu0 %215
  %s218 = sor.u32 256, 8
  %219 = vbcast.lane.b32.xlu0 %v213, %s218
  %v220 = vpop.permute.xlu0 %219
  %s222 = sor.u32 256, 16
  %223 = vbcast.lane.b32.xlu0 %v213, %s222
  %v224 = vpop.permute.xlu0 %223
  %s226 = sor.u32 256, 24
  %227 = vbcast.lane.b32.xlu0 %v213, %s226
  %v228 = vpop.permute.xlu0 %227
  %v229 = vlaneseq
  %v230 = vshrl.u32 %v229, 7
  %v231 = vsub.s32 2, %v230
  %v232 = vrot.slane %v175, %v231
  %234 = vbcast.lane.b32.xlu0 %v232, 256
  %v235 = vpop.permute.xlu0 %234
  %s237 = sor.u32 256, 8
  %238 = vbcast.lane.b32.xlu0 %v232, %s237
  %v239 = vpop.permute.xlu0 %238
  %s241 = sor.u32 256, 16
  %242 = vbcast.lane.b32.xlu0 %v232, %s241
  %v243 = vpop.permute.xlu0 %242
  %s245 = sor.u32 256, 24
  %246 = vbcast.lane.b32.xlu0 %v232, %s245
  %v247 = vpop.permute.xlu0 %246
  %v248 = vlaneseq
  %v249 = vshrl.u32 %v248, 7
  %v250 = vsub.s32 3, %v249
  %v251 = vrot.slane %v175, %v250
  %253 = vbcast.lane.b32.xlu0 %v251, 256
  %v254 = vpop.permute.xlu0 %253
  %s256 = sor.u32 256, 8
  %257 = vbcast.lane.b32.xlu0 %v251, %s256
  %v258 = vpop.permute.xlu0 %257
  %s260 = sor.u32 256, 16
  %261 = vbcast.lane.b32.xlu0 %v251, %s260
  %v262 = vpop.permute.xlu0 %261
  %s264 = sor.u32 256, 24
  %265 = vbcast.lane.b32.xlu0 %v251, %s264
  %v266 = vpop.permute.xlu0 %265
  %v267 = vlaneseq
  %v268 = vshrl.u32 %v267, 7
  %v269 = vsub.s32 4, %v268
  %v270 = vrot.slane %v175, %v269
  %272 = vbcast.lane.b32.xlu0 %v270, 256
  %v273 = vpop.permute.xlu0 %272
  %s275 = sor.u32 256, 8
  %276 = vbcast.lane.b32.xlu0 %v270, %s275
  %v277 = vpop.permute.xlu0 %276
  %s279 = sor.u32 256, 16
  %280 = vbcast.lane.b32.xlu0 %v270, %s279
  %v281 = vpop.permute.xlu0 %280
  %s283 = sor.u32 256, 24
  %284 = vbcast.lane.b32.xlu0 %v270, %s283
  %v285 = vpop.permute.xlu0 %284
  %v286 = vlaneseq
  %v287 = vshrl.u32 %v286, 7
  %v288 = vsub.s32 5, %v287
  %v289 = vrot.slane %v175, %v288
  %291 = vbcast.lane.b32.xlu0 %v289, 256
  %v292 = vpop.permute.xlu0 %291
  %s294 = sor.u32 256, 8
  %295 = vbcast.lane.b32.xlu0 %v289, %s294
  %v296 = vpop.permute.xlu0 %295
  %s298 = sor.u32 256, 16
  %299 = vbcast.lane.b32.xlu0 %v289, %s298
  %v300 = vpop.permute.xlu0 %299
  %s302 = sor.u32 256, 24
  %303 = vbcast.lane.b32.xlu0 %v289, %s302
  %v304 = vpop.permute.xlu0 %303
  %v305 = vlaneseq
  %v306 = vshrl.u32 %v305, 7
  %v307 = vsub.s32 6, %v306
  %v308 = vrot.slane %v175, %v307
  %310 = vbcast.lane.b32.xlu0 %v308, 256
  %v311 = vpop.permute.xlu0 %310
  %s313 = sor.u32 256, 8
  %314 = vbcast.lane.b32.xlu0 %v308, %s313
  %v315 = vpop.permute.xlu0 %314
  %s317 = sor.u32 256, 16
  %318 = vbcast.lane.b32.xlu0 %v308, %s317
  %v319 = vpop.permute.xlu0 %318
  %s321 = sor.u32 256, 24
  %322 = vbcast.lane.b32.xlu0 %v308, %s321
  %v323 = vpop.permute.xlu0 %322
  %v324 = vlaneseq
  %v325 = vshrl.u32 %v324, 7
  %v326 = vsub.s32 7, %v325
  %v327 = vrot.slane %v175, %v326
  %329 = vbcast.lane.b32.xlu0 %v327, 256
  %v330 = vpop.permute.xlu0 %329
  %s332 = sor.u32 256, 8
  %333 = vbcast.lane.b32.xlu0 %v327, %s332
  %v334 = vpop.permute.xlu0 %333
  %s336 = sor.u32 256, 16
  %337 = vbcast.lane.b32.xlu0 %v327, %s336
  %v338 = vpop.permute.xlu0 %337
  %s340 = sor.u32 256, 24
  %341 = vbcast.lane.b32.xlu0 %v327, %s340
  %v342 = vpop.permute.xlu0 %341
  %v344 = vcombine.high %v176, %v176
  %v346 = vunpack.c.l.s4 1966171168
  %v347 = vunpack.c.0.s8 %v346
  %v348 = vlaneseq
  %v349 = vshrl.u32 %v348, 7
  %v350 = vsub.s32 %v347, %v349
  %v351 = vrot.slane %v176, %v350
  %v353 = vunpack.c.l.s4 1966171168
  %v354 = vunpack.c.0.s8 %v353
  %v355 = vlaneseq
  %v356 = vshrl.u32 %v355, 7
  %v357 = vsub.s32 %v354, %v356
  %v358 = vrot.slane %v344, %v357
  %v359 = vcombine.high %v351, %v351
  %v360 = vcombine.high %v358, %v358
  %v362 = vunpack.c.l.s4 1966171168
  %v363 = vunpack.c.0.s8 %v362
  %v364 = vlaneseq
  %v365 = vshrl.u32 %v364, 7
  %v366 = vsub.s32 %v363, %v365
  %v367 = vrot.slane %v351, %v366
  %v369 = vunpack.c.l.s4 1966171168
  %v370 = vunpack.c.0.s8 %v369
  %v371 = vlaneseq
  %v372 = vshrl.u32 %v371, 7
  %v373 = vsub.s32 %v370, %v372
  %v374 = vrot.slane %v358, %v373
  %v376 = vunpack.c.l.s4 1966171168
  %v377 = vunpack.c.0.s8 %v376
  %v378 = vlaneseq
  %v379 = vshrl.u32 %v378, 7
  %v380 = vsub.s32 %v377, %v379
  %v381 = vrot.slane %v359, %v380
  %v383 = vunpack.c.l.s4 1966171168
  %v384 = vunpack.c.0.s8 %v383
  %v385 = vlaneseq
  %v386 = vshrl.u32 %v385, 7
  %v387 = vsub.s32 %v384, %v386
  %v388 = vrot.slane %v360, %v387
  %v389 = vcombine.high %v367, %v367
  %v390 = vcombine.high %v374, %v374
  %v391 = vcombine.high %v381, %v381
  %v392 = vcombine.high %v388, %v388
  %v393 = vlaneseq
  %v394 = vshrl.u32 %v393, 7
  %v395 = vsub.s32 0, %v394
  %v396 = vrot.slane %v367, %v395
  %v397 = vlaneseq
  %v398 = vshrl.u32 %v397, 7
  %v399 = vsub.s32 0, %v398
  %v400 = vrot.slane %v381, %v399
  %v401 = vlaneseq
  %v402 = vshrl.u32 %v401, 7
  %v403 = vsub.s32 0, %v402
  %v404 = vrot.slane %v389, %v403
  %v405 = vlaneseq
  %v406 = vshrl.u32 %v405, 7
  %v407 = vsub.s32 0, %v406
  %v408 = vrot.slane %v391, %v407
  %v409 = vlaneseq
  %v410 = vshrl.u32 %v409, 7
  %v411 = vsub.s32 0, %v410
  %v412 = vrot.slane %v374, %v411
  %v413 = vlaneseq
  %v414 = vshrl.u32 %v413, 7
  %v415 = vsub.s32 0, %v414
  %v416 = vrot.slane %v388, %v415
  %v417 = vlaneseq
  %v418 = vshrl.u32 %v417, 7
  %v419 = vsub.s32 0, %v418
  %v420 = vrot.slane %v390, %v419
  %v421 = vlaneseq
  %v422 = vshrl.u32 %v421, 7
  %v423 = vsub.s32 0, %v422
  %v424 = vrot.slane %v392, %v423
  %v433 = vadd.f32 %v197, %v396
  %v434 = vadd.f32 %v201, %v396
  %v435 = vadd.f32 %v205, %v396
  %v436 = vadd.f32 %v209, %v396
  %v437 = vadd.f32 %v216, %v400
  %v438 = vadd.f32 %v220, %v400
  %v439 = vadd.f32 %v224, %v400
  %v440 = vadd.f32 %v228, %v400
  %v441 = vadd.f32 %v235, %v404
  %v442 = vadd.f32 %v239, %v404
  %v443 = vadd.f32 %v243, %v404
  %v444 = vadd.f32 %v247, %v404
  %v445 = vadd.f32 %v254, %v408
  %v446 = vadd.f32 %v258, %v408
  %v447 = vadd.f32 %v262, %v408
  %v448 = vadd.f32 %v266, %v408
  %v449 = vadd.f32 %v273, %v412
  %v450 = vadd.f32 %v277, %v412
  %v451 = vadd.f32 %v281, %v412
  %v452 = vadd.f32 %v285, %v412
  %v453 = vadd.f32 %v292, %v416
  %v454 = vadd.f32 %v296, %v416
  %v455 = vadd.f32 %v300, %v416
  %v456 = vadd.f32 %v304, %v416
  %v457 = vadd.f32 %v311, %v420
  %v458 = vadd.f32 %v315, %v420
  %v459 = vadd.f32 %v319, %v420
  %v460 = vadd.f32 %v323, %v420
  %v461 = vadd.f32 %v330, %v424
  %v462 = vadd.f32 %v334, %v424
  %v463 = vadd.f32 %v338, %v424
  %v464 = vadd.f32 %v342, %v424
  %v465 = vmul.f32 %v433, 0.2
  %v466 = vmul.f32 %v434, 0.2
  %v467 = vmul.f32 %v435, 0.2
  %v468 = vmul.f32 %v436, 0.2
  %v469 = vmul.f32 %v437, 0.2
  %v470 = vmul.f32 %v438, 0.2
  %v471 = vmul.f32 %v439, 0.2
  %v472 = vmul.f32 %v440, 0.2
  %v473 = vmul.f32 %v441, 0.2
  %v474 = vmul.f32 %v442, 0.2
  %v475 = vmul.f32 %v443, 0.2
  %v476 = vmul.f32 %v444, 0.2
  %v477 = vmul.f32 %v445, 0.2
  %v478 = vmul.f32 %v446, 0.2
  %v479 = vmul.f32 %v447, 0.2
  %v480 = vmul.f32 %v448, 0.2
  %v481 = vmul.f32 %v449, 0.2
  %v482 = vmul.f32 %v450, 0.2
  %v483 = vmul.f32 %v451, 0.2
  %v484 = vmul.f32 %v452, 0.2
  %v485 = vmul.f32 %v453, 0.2
  %v486 = vmul.f32 %v454, 0.2
  %v487 = vmul.f32 %v455, 0.2
  %v488 = vmul.f32 %v456, 0.2
  %v489 = vmul.f32 %v457, 0.2
  %v490 = vmul.f32 %v458, 0.2
  %v491 = vmul.f32 %v459, 0.2
  %v492 = vmul.f32 %v460, 0.2
  %v493 = vmul.f32 %v461, 0.2
  %v494 = vmul.f32 %v462, 0.2
  %v495 = vmul.f32 %v463, 0.2
  %v496 = vmul.f32 %v464, 0.2
  %v497 = vmax.f32 %v433, %v465
  %v498 = vmax.f32 %v434, %v466
  %v499 = vmax.f32 %v435, %v467
  %v500 = vmax.f32 %v436, %v468
  %v501 = vmax.f32 %v437, %v469
  %v502 = vmax.f32 %v438, %v470
  %v503 = vmax.f32 %v439, %v471
  %v504 = vmax.f32 %v440, %v472
  %v505 = vmax.f32 %v441, %v473
  %v506 = vmax.f32 %v442, %v474
  %v507 = vmax.f32 %v443, %v475
  %v508 = vmax.f32 %v444, %v476
  %v509 = vmax.f32 %v445, %v477
  %v510 = vmax.f32 %v446, %v478
  %v511 = vmax.f32 %v447, %v479
  %v512 = vmax.f32 %v448, %v480
  %v513 = vmax.f32 %v449, %v481
  %v514 = vmax.f32 %v450, %v482
  %v515 = vmax.f32 %v451, %v483
  %v516 = vmax.f32 %v452, %v484
  %v517 = vmax.f32 %v453, %v485
  %v518 = vmax.f32 %v454, %v486
  %v519 = vmax.f32 %v455, %v487
  %v520 = vmax.f32 %v456, %v488
  %v521 = vmax.f32 %v457, %v489
  %v522 = vmax.f32 %v458, %v490
  %v523 = vmax.f32 %v459, %v491
  %v524 = vmax.f32 %v460, %v492
  %v525 = vmax.f32 %v461, %v493
  %v526 = vmax.f32 %v462, %v494
  %v527 = vmax.f32 %v463, %v495
  %v528 = vmax.f32 %v464, %v496
  %v529 = vadd.f32 %v497, %v33
  %v530 = vadd.f32 %v498, %v34
  %v531 = vadd.f32 %v499, %v35
  %v532 = vadd.f32 %v500, %v36
  %v533 = vadd.f32 %v501, %v33
  %v534 = vadd.f32 %v502, %v34
  %v535 = vadd.f32 %v503, %v35
  %v536 = vadd.f32 %v504, %v36
  %v537 = vadd.f32 %v505, %v33
  %v538 = vadd.f32 %v506, %v34
  %v539 = vadd.f32 %v507, %v35
  %v540 = vadd.f32 %v508, %v36
  %v541 = vadd.f32 %v509, %v33
  %v542 = vadd.f32 %v510, %v34
  %v543 = vadd.f32 %v511, %v35
  %v544 = vadd.f32 %v512, %v36
  %v545 = vadd.f32 %v513, %v33
  %v546 = vadd.f32 %v514, %v34
  %v547 = vadd.f32 %v515, %v35
  %v548 = vadd.f32 %v516, %v36
  %v549 = vadd.f32 %v517, %v33
  %v550 = vadd.f32 %v518, %v34
  %v551 = vadd.f32 %v519, %v35
  %v552 = vadd.f32 %v520, %v36
  %v553 = vadd.f32 %v521, %v33
  %v554 = vadd.f32 %v522, %v34
  %v555 = vadd.f32 %v523, %v35
  %v556 = vadd.f32 %v524, %v36
  %v557 = vadd.f32 %v525, %v33
  %v558 = vadd.f32 %v526, %v34
  %v559 = vadd.f32 %v527, %v35
  %v560 = vadd.f32 %v528, %v36
  %vm561 = vcmask 261120
  %v562 = vsel %vm561, %v529, -inf
  %v563 = vsel %vm561, %v530, -inf
  %v564 = vmax.f32 %v562, %v563
  %v565 = vsel %vm561, %v531, -inf
  %v566 = vmax.f32 %v564, %v565
  %v567 = vsel %vm561, %v532, -inf
  %v568 = vmax.f32 %v566, %v567
  %v569 = vrot.slane %v568, 4
  %v570 = vmax.f32 %v568, %v569
  %v571 = vrot.slane %v570, 2
  %v572 = vmax.f32 %v570, %v571
  %v573 = vrot.slane %v572, 1
  %v574 = vmax.f32 %v572, %v573
  %v575 = vsel %vm561, %v533, -inf
  %v576 = vsel %vm561, %v534, -inf
  %v577 = vmax.f32 %v575, %v576
  %v578 = vsel %vm561, %v535, -inf
  %v579 = vmax.f32 %v577, %v578
  %v580 = vsel %vm561, %v536, -inf
  %v581 = vmax.f32 %v579, %v580
  %v582 = vrot.slane %v581, 4
  %v583 = vmax.f32 %v581, %v582
  %v584 = vrot.slane %v583, 2
  %v585 = vmax.f32 %v583, %v584
  %v586 = vrot.slane %v585, 1
  %v587 = vmax.f32 %v585, %v586
  %v588 = vsel %vm561, %v537, -inf
  %v589 = vsel %vm561, %v538, -inf
  %v590 = vmax.f32 %v588, %v589
  %v591 = vsel %vm561, %v539, -inf
  %v592 = vmax.f32 %v590, %v591
  %v593 = vsel %vm561, %v540, -inf
  %v594 = vmax.f32 %v592, %v593
  %v595 = vrot.slane %v594, 4
  %v596 = vmax.f32 %v594, %v595
  %v597 = vrot.slane %v596, 2
  %v598 = vmax.f32 %v596, %v597
  %v599 = vrot.slane %v598, 1
  %v600 = vmax.f32 %v598, %v599
  %v601 = vsel %vm561, %v541, -inf
  %v602 = vsel %vm561, %v542, -inf
  %v603 = vmax.f32 %v601, %v602
  %v604 = vsel %vm561, %v543, -inf
  %v605 = vmax.f32 %v603, %v604
  %v606 = vsel %vm561, %v544, -inf
  %v607 = vmax.f32 %v605, %v606
  %v608 = vrot.slane %v607, 4
  %v609 = vmax.f32 %v607, %v608
  %v610 = vrot.slane %v609, 2
  %v611 = vmax.f32 %v609, %v610
  %v612 = vrot.slane %v611, 1
  %v613 = vmax.f32 %v611, %v612
  %v614 = vsel %vm561, %v545, -inf
  %v615 = vsel %vm561, %v546, -inf
  %v616 = vmax.f32 %v614, %v615
  %v617 = vsel %vm561, %v547, -inf
  %v618 = vmax.f32 %v616, %v617
  %v619 = vsel %vm561, %v548, -inf
  %v620 = vmax.f32 %v618, %v619
  %v621 = vrot.slane %v620, 4
  %v622 = vmax.f32 %v620, %v621
  %v623 = vrot.slane %v622, 2
  %v624 = vmax.f32 %v622, %v623
  %v625 = vrot.slane %v624, 1
  %v626 = vmax.f32 %v624, %v625
  %v627 = vsel %vm561, %v549, -inf
  %v628 = vsel %vm561, %v550, -inf
  %v629 = vmax.f32 %v627, %v628
  %v630 = vsel %vm561, %v551, -inf
  %v631 = vmax.f32 %v629, %v630
  %v632 = vsel %vm561, %v552, -inf
  %v633 = vmax.f32 %v631, %v632
  %v634 = vrot.slane %v633, 4
  %v635 = vmax.f32 %v633, %v634
  %v636 = vrot.slane %v635, 2
  %v637 = vmax.f32 %v635, %v636
  %v638 = vrot.slane %v637, 1
  %v639 = vmax.f32 %v637, %v638
  %v640 = vsel %vm561, %v553, -inf
  %v641 = vsel %vm561, %v554, -inf
  %v642 = vmax.f32 %v640, %v641
  %v643 = vsel %vm561, %v555, -inf
  %v644 = vmax.f32 %v642, %v643
  %v645 = vsel %vm561, %v556, -inf
  %v646 = vmax.f32 %v644, %v645
  %v647 = vrot.slane %v646, 4
  %v648 = vmax.f32 %v646, %v647
  %v649 = vrot.slane %v648, 2
  %v650 = vmax.f32 %v648, %v649
  %v651 = vrot.slane %v650, 1
  %v652 = vmax.f32 %v650, %v651
  %v653 = vsel %vm561, %v557, -inf
  %v654 = vsel %vm561, %v558, -inf
  %v655 = vmax.f32 %v653, %v654
  %v656 = vsel %vm561, %v559, -inf
  %v657 = vmax.f32 %v655, %v656
  %v658 = vsel %vm561, %v560, -inf
  %v659 = vmax.f32 %v657, %v658
  %v660 = vrot.slane %v659, 4
  %v661 = vmax.f32 %v659, %v660
  %v662 = vrot.slane %v661, 2
  %v663 = vmax.f32 %v661, %v662
  %v664 = vrot.slane %v663, 1
  %v665 = vmax.f32 %v663, %v664
  %v666 = vsub.f32 %v529, %v574
  %v667 = vsub.f32 %v530, %v574
  %v668 = vsub.f32 %v531, %v574
  %v669 = vsub.f32 %v532, %v574
  %v670 = vsub.f32 %v533, %v587
  %v671 = vsub.f32 %v534, %v587
  %v672 = vsub.f32 %v535, %v587
  %v673 = vsub.f32 %v536, %v587
  %v674 = vsub.f32 %v537, %v600
  %v675 = vsub.f32 %v538, %v600
  %v676 = vsub.f32 %v539, %v600
  %v677 = vsub.f32 %v540, %v600
  %v678 = vsub.f32 %v541, %v613
  %v679 = vsub.f32 %v542, %v613
  %v680 = vsub.f32 %v543, %v613
  %v681 = vsub.f32 %v544, %v613
  %v682 = vsub.f32 %v545, %v626
  %v683 = vsub.f32 %v546, %v626
  %v684 = vsub.f32 %v547, %v626
  %v685 = vsub.f32 %v548, %v626
  %v686 = vsub.f32 %v549, %v639
  %v687 = vsub.f32 %v550, %v639
  %v688 = vsub.f32 %v551, %v639
  %v689 = vsub.f32 %v552, %v639
  %v690 = vsub.f32 %v553, %v652
  %v691 = vsub.f32 %v554, %v652
  %v692 = vsub.f32 %v555, %v652
  %v693 = vsub.f32 %v556, %v652
  %v694 = vsub.f32 %v557, %v665
  %v695 = vsub.f32 %v558, %v665
  %v696 = vsub.f32 %v559, %v665
  %v697 = vsub.f32 %v560, %v665
  %v698 = vmul.f32 %v666, 1.442695
  %v699 = vpow.pop %v698
  %v700 = vmul.f32 %v667, 1.442695
  %v701 = vpow.pop %v700
  %v702 = vmul.f32 %v668, 1.442695
  %v703 = vpow.pop %v702
  %v704 = vmul.f32 %v669, 1.442695
  %v705 = vpow.pop %v704
  %v706 = vmul.f32 %v670, 1.442695
  %v707 = vpow.pop %v706
  %v708 = vmul.f32 %v671, 1.442695
  %v709 = vpow.pop %v708
  %v710 = vmul.f32 %v672, 1.442695
  %v711 = vpow.pop %v710
  %v712 = vmul.f32 %v673, 1.442695
  %v713 = vpow.pop %v712
  %v714 = vmul.f32 %v674, 1.442695
  %v715 = vpow.pop %v714
  %v716 = vmul.f32 %v675, 1.442695
  %v717 = vpow.pop %v716
  %v718 = vmul.f32 %v676, 1.442695
  %v719 = vpow.pop %v718
  %v720 = vmul.f32 %v677, 1.442695
  %v721 = vpow.pop %v720
  %v722 = vmul.f32 %v678, 1.442695
  %v723 = vpow.pop %v722
  %v724 = vmul.f32 %v679, 1.442695
  %v725 = vpow.pop %v724
  %v726 = vmul.f32 %v680, 1.442695
  %v727 = vpow.pop %v726
  %v728 = vmul.f32 %v681, 1.442695
  %v729 = vpow.pop %v728
  %v730 = vmul.f32 %v682, 1.442695
  %v731 = vpow.pop %v730
  %v732 = vmul.f32 %v683, 1.442695
  %v733 = vpow.pop %v732
  %v734 = vmul.f32 %v684, 1.442695
  %v735 = vpow.pop %v734
  %v736 = vmul.f32 %v685, 1.442695
  %v737 = vpow.pop %v736
  %v738 = vmul.f32 %v686, 1.442695
  %v739 = vpow.pop %v738
  %v740 = vmul.f32 %v687, 1.442695
  %v741 = vpow.pop %v740
  %v742 = vmul.f32 %v688, 1.442695
  %v743 = vpow.pop %v742
  %v744 = vmul.f32 %v689, 1.442695
  %v745 = vpow.pop %v744
  %v746 = vmul.f32 %v690, 1.442695
  %v747 = vpow.pop %v746
  %v748 = vmul.f32 %v691, 1.442695
  %v749 = vpow.pop %v748
  %v750 = vmul.f32 %v692, 1.442695
  %v751 = vpow.pop %v750
  %v752 = vmul.f32 %v693, 1.442695
  %v753 = vpow.pop %v752
  %v754 = vmul.f32 %v694, 1.442695
  %v755 = vpow.pop %v754
  %v756 = vmul.f32 %v695, 1.442695
  %v757 = vpow.pop %v756
  %v758 = vmul.f32 %v696, 1.442695
  %v759 = vpow.pop %v758
  %v760 = vmul.f32 %v697, 1.442695
  %v761 = vpow.pop %v760
  %v762 = vsel %vm561, %v699, 0.0
  %v763 = vsel %vm561, %v701, 0.0
  %v764 = vadd.f32 %v762, %v763
  %v765 = vsel %vm561, %v703, 0.0
  %v766 = vadd.f32 %v764, %v765
  %v767 = vsel %vm561, %v705, 0.0
  %v768 = vadd.f32 %v766, %v767
  %v769 = vrot.slane %v768, 4
  %v770 = vadd.f32 %v768, %v769
  %v771 = vrot.slane %v770, 2
  %v772 = vadd.f32 %v770, %v771
  %v773 = vrot.slane %v772, 1
  %v774 = vadd.f32 %v772, %v773
  %v775 = vsel %vm561, %v707, 0.0
  %v776 = vsel %vm561, %v709, 0.0
  %v777 = vadd.f32 %v775, %v776
  %v778 = vsel %vm561, %v711, 0.0
  %v779 = vadd.f32 %v777, %v778
  %v780 = vsel %vm561, %v713, 0.0
  %v781 = vadd.f32 %v779, %v780
  %v782 = vrot.slane %v781, 4
  %v783 = vadd.f32 %v781, %v782
  %v784 = vrot.slane %v783, 2
  %v785 = vadd.f32 %v783, %v784
  %v786 = vrot.slane %v785, 1
  %v787 = vadd.f32 %v785, %v786
  %v788 = vsel %vm561, %v715, 0.0
  %v789 = vsel %vm561, %v717, 0.0
  %v790 = vadd.f32 %v788, %v789
  %v791 = vsel %vm561, %v719, 0.0
  %v792 = vadd.f32 %v790, %v791
  %v793 = vsel %vm561, %v721, 0.0
  %v794 = vadd.f32 %v792, %v793
  %v795 = vrot.slane %v794, 4
  %v796 = vadd.f32 %v794, %v795
  %v797 = vrot.slane %v796, 2
  %v798 = vadd.f32 %v796, %v797
  %v799 = vrot.slane %v798, 1
  %v800 = vadd.f32 %v798, %v799
  %v801 = vsel %vm561, %v723, 0.0
  %v802 = vsel %vm561, %v725, 0.0
  %v803 = vadd.f32 %v801, %v802
  %v804 = vsel %vm561, %v727, 0.0
  %v805 = vadd.f32 %v803, %v804
  %v806 = vsel %vm561, %v729, 0.0
  %v807 = vadd.f32 %v805, %v806
  %v808 = vrot.slane %v807, 4
  %v809 = vadd.f32 %v807, %v808
  %v810 = vrot.slane %v809, 2
  %v811 = vadd.f32 %v809, %v810
  %v812 = vrot.slane %v811, 1
  %v813 = vadd.f32 %v811, %v812
  %v814 = vsel %vm561, %v731, 0.0
  %v815 = vsel %vm561, %v733, 0.0
  %v816 = vadd.f32 %v814, %v815
  %v817 = vsel %vm561, %v735, 0.0
  %v818 = vadd.f32 %v816, %v817
  %v819 = vsel %vm561, %v737, 0.0
  %v820 = vadd.f32 %v818, %v819
  %v821 = vrot.slane %v820, 4
  %v822 = vadd.f32 %v820, %v821
  %v823 = vrot.slane %v822, 2
  %v824 = vadd.f32 %v822, %v823
  %v825 = vrot.slane %v824, 1
  %v826 = vadd.f32 %v824, %v825
  %v827 = vsel %vm561, %v739, 0.0
  %v828 = vsel %vm561, %v741, 0.0
  %v829 = vadd.f32 %v827, %v828
  %v830 = vsel %vm561, %v743, 0.0
  %v831 = vadd.f32 %v829, %v830
  %v832 = vsel %vm561, %v745, 0.0
  %v833 = vadd.f32 %v831, %v832
  %v834 = vrot.slane %v833, 4
  %v835 = vadd.f32 %v833, %v834
  %v836 = vrot.slane %v835, 2
  %v837 = vadd.f32 %v835, %v836
  %v838 = vrot.slane %v837, 1
  %v839 = vadd.f32 %v837, %v838
  %v840 = vsel %vm561, %v747, 0.0
  %v841 = vsel %vm561, %v749, 0.0
  %v842 = vadd.f32 %v840, %v841
  %v843 = vsel %vm561, %v751, 0.0
  %v844 = vadd.f32 %v842, %v843
  %v845 = vsel %vm561, %v753, 0.0
  %v846 = vadd.f32 %v844, %v845
  %v847 = vrot.slane %v846, 4
  %v848 = vadd.f32 %v846, %v847
  %v849 = vrot.slane %v848, 2
  %v850 = vadd.f32 %v848, %v849
  %v851 = vrot.slane %v850, 1
  %v852 = vadd.f32 %v850, %v851
  %v853 = vsel %vm561, %v755, 0.0
  %v854 = vsel %vm561, %v757, 0.0
  %v855 = vadd.f32 %v853, %v854
  %v856 = vsel %vm561, %v759, 0.0
  %v857 = vadd.f32 %v855, %v856
  %v858 = vsel %vm561, %v761, 0.0
  %v859 = vadd.f32 %v857, %v858
  %v860 = vrot.slane %v859, 4
  %v861 = vadd.f32 %v859, %v860
  %v862 = vrot.slane %v861, 2
  %v863 = vadd.f32 %v861, %v862
  %v864 = vrot.slane %v863, 1
  %v865 = vadd.f32 %v863, %v864
  %v866 = vrcp.pop %v774
  %v867 = vrcp.pop %v787
  %v868 = vrcp.pop %v800
  %v869 = vrcp.pop %v813
  %v870 = vrcp.pop %v826
  %v871 = vrcp.pop %v839
  %v872 = vrcp.pop %v852
  %v873 = vrcp.pop %v865
  %v874 = vmul.f32 %v699, %v866
  %v875 = vmul.f32 %v701, %v866
  %v876 = vmul.f32 %v703, %v866
  %v877 = vmul.f32 %v705, %v866
  %v878 = vmul.f32 %v707, %v867
  %v879 = vmul.f32 %v709, %v867
  %v880 = vmul.f32 %v711, %v867
  %v881 = vmul.f32 %v713, %v867
  %v882 = vmul.f32 %v715, %v868
  %v883 = vmul.f32 %v717, %v868
  %v884 = vmul.f32 %v719, %v868
  %v885 = vmul.f32 %v721, %v868
  %v886 = vmul.f32 %v723, %v869
  %v887 = vmul.f32 %v725, %v869
  %v888 = vmul.f32 %v727, %v869
  %v889 = vmul.f32 %v729, %v869
  %v890 = vmul.f32 %v731, %v870
  %v891 = vmul.f32 %v733, %v870
  %v892 = vmul.f32 %v735, %v870
  %v893 = vmul.f32 %v737, %v870
  %v894 = vmul.f32 %v739, %v871
  %v895 = vmul.f32 %v741, %v871
  %v896 = vmul.f32 %v743, %v871
  %v897 = vmul.f32 %v745, %v871
  %v898 = vmul.f32 %v747, %v872
  %v899 = vmul.f32 %v749, %v872
  %v900 = vmul.f32 %v751, %v872
  %v901 = vmul.f32 %v753, %v872
  %v902 = vmul.f32 %v755, %v873
  %v903 = vmul.f32 %v757, %v873
  %v904 = vmul.f32 %v759, %v873
  %v905 = vmul.f32 %v761, %v873
  %v907 = vcombine.high %v37, %v37
  %v909 = vunpack.c.l.s4 1966171168
  %v910 = vunpack.c.0.s8 %v909
  %v911 = vlaneseq
  %v912 = vshrl.u32 %v911, 7
  %v913 = vsub.s32 %v910, %v912
  %v914 = vrot.slane %v37, %v913
  %v916 = vunpack.c.l.s4 1966171168
  %v917 = vunpack.c.0.s8 %v916
  %v918 = vlaneseq
  %v919 = vshrl.u32 %v918, 7
  %v920 = vsub.s32 %v917, %v919
  %v921 = vrot.slane %v907, %v920
  %v922 = vcombine.high %v914, %v914
  %v923 = vcombine.high %v921, %v921
  %v925 = vunpack.c.l.s4 1966171168
  %v926 = vunpack.c.0.s8 %v925
  %v927 = vlaneseq
  %v928 = vshrl.u32 %v927, 7
  %v929 = vsub.s32 %v926, %v928
  %v930 = vrot.slane %v914, %v929
  %v932 = vunpack.c.l.s4 1966171168
  %v933 = vunpack.c.0.s8 %v932
  %v934 = vlaneseq
  %v935 = vshrl.u32 %v934, 7
  %v936 = vsub.s32 %v933, %v935
  %v937 = vrot.slane %v921, %v936
  %v939 = vunpack.c.l.s4 1966171168
  %v940 = vunpack.c.0.s8 %v939
  %v941 = vlaneseq
  %v942 = vshrl.u32 %v941, 7
  %v943 = vsub.s32 %v940, %v942
  %v944 = vrot.slane %v922, %v943
  %v946 = vunpack.c.l.s4 1966171168
  %v947 = vunpack.c.0.s8 %v946
  %v948 = vlaneseq
  %v949 = vshrl.u32 %v948, 7
  %v950 = vsub.s32 %v947, %v949
  %v951 = vrot.slane %v923, %v950
  %v952 = vcombine.high %v930, %v930
  %v953 = vcombine.high %v937, %v937
  %v954 = vcombine.high %v944, %v944
  %v955 = vcombine.high %v951, %v951
  %v956 = vlaneseq
  %v957 = vshrl.u32 %v956, 7
  %v958 = vsub.s32 0, %v957
  %v959 = vrot.slane %v930, %v958
  %v960 = vlaneseq
  %v961 = vshrl.u32 %v960, 7
  %v962 = vsub.s32 0, %v961
  %v963 = vrot.slane %v944, %v962
  %v964 = vlaneseq
  %v965 = vshrl.u32 %v964, 7
  %v966 = vsub.s32 0, %v965
  %v967 = vrot.slane %v952, %v966
  %v968 = vlaneseq
  %v969 = vshrl.u32 %v968, 7
  %v970 = vsub.s32 0, %v969
  %v971 = vrot.slane %v954, %v970
  %v972 = vlaneseq
  %v973 = vshrl.u32 %v972, 7
  %v974 = vsub.s32 0, %v973
  %v975 = vrot.slane %v937, %v974
  %v976 = vlaneseq
  %v977 = vshrl.u32 %v976, 7
  %v978 = vsub.s32 0, %v977
  %v979 = vrot.slane %v951, %v978
  %v980 = vlaneseq
  %v981 = vshrl.u32 %v980, 7
  %v982 = vsub.s32 0, %v981
  %v983 = vrot.slane %v953, %v982
  %v984 = vlaneseq
  %v985 = vshrl.u32 %v984, 7
  %v986 = vsub.s32 0, %v985
  %v987 = vrot.slane %v955, %v986
  %v996 = vmul.f32 %v125, %v959
  %v997 = vmul.f32 %v130, %v959
  %v998 = vmul.f32 %v135, %v959
  %v999 = vmul.f32 %v140, %v959
  %v1000 = vmul.f32 %v125, %v963
  %v1001 = vmul.f32 %v130, %v963
  %v1002 = vmul.f32 %v135, %v963
  %v1003 = vmul.f32 %v140, %v963
  %v1004 = vmul.f32 %v125, %v967
  %v1005 = vmul.f32 %v130, %v967
  %v1006 = vmul.f32 %v135, %v967
  %v1007 = vmul.f32 %v140, %v967
  %v1008 = vmul.f32 %v125, %v971
  %v1009 = vmul.f32 %v130, %v971
  %v1010 = vmul.f32 %v135, %v971
  %v1011 = vmul.f32 %v140, %v971
  %v1012 = vmul.f32 %v125, %v975
  %v1013 = vmul.f32 %v130, %v975
  %v1014 = vmul.f32 %v135, %v975
  %v1015 = vmul.f32 %v140, %v975
  %v1016 = vmul.f32 %v125, %v979
  %v1017 = vmul.f32 %v130, %v979
  %v1018 = vmul.f32 %v135, %v979
  %v1019 = vmul.f32 %v140, %v979
  %v1020 = vmul.f32 %v125, %v983
  %v1021 = vmul.f32 %v130, %v983
  %v1022 = vmul.f32 %v135, %v983
  %v1023 = vmul.f32 %v140, %v983
  %v1024 = vmul.f32 %v125, %v987
  %v1025 = vmul.f32 %v130, %v987
  %v1026 = vmul.f32 %v135, %v987
  %v1027 = vmul.f32 %v140, %v987
  %1028 = vxpose.xlu0.b32.start [1/16] %v874, 128
  %1029 = vxpose.xlu0.b32.cont [2/16] %v875, 128
  %1030 = vxpose.xlu0.b32.cont [3/16] %v876, 128
  %1031 = vxpose.xlu0.b32.cont [4/16] %v877, 128
  %1032 = vxpose.xlu0.b32.cont [5/16] %v878, 128
  %1033 = vxpose.xlu0.b32.cont [6/16] %v879, 128
  %1034 = vxpose.xlu0.b32.cont [7/16] %v880, 128
  %1035 = vxpose.xlu0.b32.cont [8/16] %v881, 128
  %1036 = vxpose.xlu0.b32.cont [9/16] %v882, 128
  %1037 = vxpose.xlu0.b32.cont [10/16] %v883, 128
  %1038 = vxpose.xlu0.b32.cont [11/16] %v884, 128
  %1039 = vxpose.xlu0.b32.cont [12/16] %v885, 128
  %1040 = vxpose.xlu0.b32.cont [13/16] %v886, 128
  %1041 = vxpose.xlu0.b32.cont [14/16] %v887, 128
  %1042 = vxpose.xlu0.b32.cont [15/16] %v888, 128
  %1043 = vxpose.xlu0.b32.end [16/16] %v889, 128
  %v1044 = vpop.trf.xlu0
  %v1045 = vpop.trf.xlu0
  %v1046 = vpop.trf.xlu0
  %v1047 = vpop.trf.xlu0
  %v1048 = vpop.trf.xlu0
  %v1049 = vpop.trf.xlu0
  %v1050 = vpop.trf.xlu0
  %v1051 = vpop.trf.xlu0
  %v1052 = vpop.trf.xlu0
  %v1053 = vpop.trf.xlu0
  %v1054 = vpop.trf.xlu0
  %v1055 = vpop.trf.xlu0
  %v1056 = vpop.trf.xlu0
  %v1057 = vpop.trf.xlu0
  %v1058 = vpop.trf.xlu0
  %v1059 = vpop.trf.xlu0
  %1060 = vxpose.xlu0.b32.start [1/16] %v890, 128
  %1061 = vxpose.xlu0.b32.cont [2/16] %v891, 128
  %1062 = vxpose.xlu0.b32.cont [3/16] %v892, 128
  %1063 = vxpose.xlu0.b32.cont [4/16] %v893, 128
  %1064 = vxpose.xlu0.b32.cont [5/16] %v894, 128
  %1065 = vxpose.xlu0.b32.cont [6/16] %v895, 128
  %1066 = vxpose.xlu0.b32.cont [7/16] %v896, 128
  %1067 = vxpose.xlu0.b32.cont [8/16] %v897, 128
  %1068 = vxpose.xlu0.b32.cont [9/16] %v898, 128
  %1069 = vxpose.xlu0.b32.cont [10/16] %v899, 128
  %1070 = vxpose.xlu0.b32.cont [11/16] %v900, 128
  %1071 = vxpose.xlu0.b32.cont [12/16] %v901, 128
  %1072 = vxpose.xlu0.b32.cont [13/16] %v902, 128
  %1073 = vxpose.xlu0.b32.cont [14/16] %v903, 128
  %1074 = vxpose.xlu0.b32.cont [15/16] %v904, 128
  %1075 = vxpose.xlu0.b32.end [16/16] %v905, 128
  %v1076 = vpop.trf.xlu0
  %v1077 = vpop.trf.xlu0
  %v1078 = vpop.trf.xlu0
  %v1079 = vpop.trf.xlu0
  %v1080 = vpop.trf.xlu0
  %v1081 = vpop.trf.xlu0
  %v1082 = vpop.trf.xlu0
  %v1083 = vpop.trf.xlu0
  %v1084 = vpop.trf.xlu0
  %v1085 = vpop.trf.xlu0
  %v1086 = vpop.trf.xlu0
  %v1087 = vpop.trf.xlu0
  %v1088 = vpop.trf.xlu0
  %v1089 = vpop.trf.xlu0
  %v1090 = vpop.trf.xlu0
  %v1091 = vpop.trf.xlu0
  %v1092 = vpack.c.bf16 %v1045, %v1044
  %v1093 = vpack.c.bf16 %v1077, %v1076
  %v1094 = vpack.c.bf16 %v1047, %v1046
  %v1095 = vpack.c.bf16 %v1079, %v1078
  %v1096 = vpack.c.bf16 %v997, %v996
  %v1097 = vpack.c.bf16 %v999, %v998
  %v1098 = vpack.c.bf16 %v1001, %v1000
  %v1099 = vpack.c.bf16 %v1003, %v1002
  %v1100 = vpack.c.bf16 %v1005, %v1004
  %v1101 = vpack.c.bf16 %v1007, %v1006
  %v1102 = vpack.c.bf16 %v1009, %v1008
  %v1103 = vpack.c.bf16 %v1011, %v1010
  %v1104 = vpack.c.bf16 %v1013, %v1012
  %v1105 = vpack.c.bf16 %v1015, %v1014
  %v1106 = vpack.c.bf16 %v1017, %v1016
  %v1107 = vpack.c.bf16 %v1019, %v1018
  %v1108 = vpack.c.bf16 %v1021, %v1020
  %v1109 = vpack.c.bf16 %v1023, %v1022
  %v1110 = vpack.c.bf16 %v1025, %v1024
  %v1111 = vpack.c.bf16 %v1027, %v1026
  %v1113 = vlaneseq
  %v1114 = vshrl.u32 %v1113, 7
  %v1115 = vsub.s32 0, %v1114
  %v1116 = vrot.slane %v44, %v1115
  %1118 = vmatprep.subr.bf16.mxu0 0
  %1119 = vmatpush1.bf16.msra.mxu0 %v1096
  %1120 = vmatprep.subr.bf16.mxu0 0
  %1121 = vmatpush1.bf16.msra.mxu0 %v1097
  %1122 = vmatprep.subr.bf16.mxu0 0
  %1123 = vmatpush1.bf16.msra.mxu0 %v1098
  %1124 = vmatprep.subr.bf16.mxu0 0
  %1125 = vmatpush1.bf16.msra.mxu0 %v1099
  %1126 = vmatprep.subr.bf16.mxu0 0
  %1127 = vmatpush1.bf16.msra.mxu0 %v1100
  %1128 = vmatprep.subr.bf16.mxu0 0
  %1129 = vmatpush1.bf16.msra.mxu0 %v1101
  %1130 = vmatprep.subr.bf16.mxu0 0
  %1131 = vmatpush1.bf16.msra.mxu0 %v1102
  %1132 = vmatprep.subr.bf16.mxu0 0
  %1133 = vmatpush1.bf16.msra.mxu0 %v1103
  %1134 = vmatprep.subr.bf16.mxu0 0
  %1135 = vmatpush1.bf16.msra.mxu0 %v1104
  %1136 = vmatprep.subr.bf16.mxu0 0
  %1137 = vmatpush1.bf16.msra.mxu0 %v1105
  %1138 = vmatprep.subr.bf16.mxu0 0
  %1139 = vmatpush1.bf16.msra.mxu0 %v1106
  %1140 = vmatprep.subr.bf16.mxu0 0
  %1141 = vmatpush1.bf16.msra.mxu0 %v1107
  %1142 = vmatprep.subr.bf16.mxu0 0
  %1143 = vmatpush1.bf16.msra.mxu0 %v1108
  %1144 = vmatprep.subr.bf16.mxu0 0
  %1145 = vmatpush1.bf16.msra.mxu0 %v1109
  %1146 = vmatprep.subr.bf16.mxu0 0
  %1147 = vmatpush1.bf16.msra.mxu0 %v1110
  %1148 = vmatprep.subr.bf16.mxu0 0
  %1149 = vmatpush1.bf16.msra.mxu0 %v1111
  %1150 = vmatprep.mubr.bf16.mxu0 %v1093
  %1151 = vmatmul.mubr.bf16.gmra.mrb[0].mxu0 %v1092
  %v1152 = vpop.f32.mrb[0].mxu0
  %v1153 = vadd.f32 %v1116, %v1152
  %v1154 = vpop.f32.mrb[0].mxu0
  %v1155 = vpop.f32.mrb[0].mxu0
  %v1156 = vadd.f32 %v1116, %v1155
  %v1157 = vpop.f32.mrb[0].mxu0
  %1158 = vmatprep.mubr.bf16.mxu0 %v1095
  %1159 = vmatmul.mubr.bf16.gmra.mrb[0].mxu0 %v1094
  %v1160 = vpop.f32.mrb[0].mxu0
  %v1161 = vadd.f32 %v1116, %v1160
  %v1162 = vpop.f32.mrb[0].mxu0
  %v1163 = vpop.f32.mrb[0].mxu0
  %v1164 = vadd.f32 %v1116, %v1163
  %v1165 = vpop.f32.mrb[0].mxu0
  %1166 = vdwg.mxu0
  %v1167 = vld [vmem:[%s5] sm:$0xff]
  %v1168 = vld [vmem:[%s5 + $0x8] sm:$0xff]
  %v1169 = vld [vmem:[%s5 + $0x10] sm:$0xff]
  %v1170 = vld [vmem:[%s5 + $0x18] sm:$0xff]
  %v1171 = vld [vmem:[%s5 + $0x20] sm:$0xff]
  %v1172 = vld [vmem:[%s5 + $0x28] sm:$0xff]
  %v1173 = vld [vmem:[%s5 + $0x30] sm:$0xff]
  %v1174 = vld [vmem:[%s5 + $0x38] sm:$0xff]
  %v1175 = vld [vmem:[%s6] sm:$0x1]
  %vm1176 = vcmask 523264
  %v1178 = vsel %vm1176, %v1153, 0
  %v1181 = vsel %vm1176, %v1156, 0
  %v1184 = vsel %vm1176, %v1161, 0
  %v1187 = vsel %vm1176, %v1164, 0
  %1189 = vmatprep.subr.mxu0 0.0
  %1190 = vmatpush1.msra.mxu0 %v1167
  %1191 = vmatprep.subr.mxu0 0.0
  %1192 = vmatpush1.msra.mxu0 %v1168
  %1193 = vmatprep.subr.mxu0 0.0
  %1194 = vmatpush1.msra.mxu0 %v1169
  %1195 = vmatprep.subr.mxu0 0.0
  %1196 = vmatpush1.msra.mxu0 %v1170
  %1197 = vmatprep.subr.mxu0 0.0
  %1198 = vmatpush1.msra.mxu0 %v1171
  %1199 = vmatprep.subr.mxu0 0.0
  %1200 = vmatpush1.msra.mxu0 %v1172
  %1201 = vmatprep.subr.mxu0 0.0
  %1202 = vmatpush1.msra.mxu0 %v1173
  %1203 = vmatprep.subr.mxu0 0.0
  %1204 = vmatpush1.msra.mxu0 %v1174
  %1205 = vmatprep.subr.mxu0 0.0
  %1206 = vmatpush1.msra.mxu0 0.0
  %1207 = vmatprep.subr.mxu0 0.0
  %1208 = vmatpush1.msra.mxu0 0.0
  %1209 = vmatprep.subr.mxu0 0.0
  %1210 = vmatpush1.msra.mxu0 0.0
  %1211 = vmatprep.subr.mxu0 0.0
  %1212 = vmatpush1.msra.mxu0 0.0
  %1213 = vmatprep.subr.mxu0 0.0
  %1214 = vmatpush1.msra.mxu0 0.0
  %1215 = vmatprep.subr.mxu0 0.0
  %1216 = vmatpush1.msra.mxu0 0.0
  %1217 = vmatprep.subr.mxu0 0.0
  %1218 = vmatpush1.msra.mxu0 0.0
  %1219 = vmatprep.subr.mxu0 0.0
  %1220 = vmatpush1.msra.mxu0 0.0
  %1221 = vmatprep.subr.mxu0 0.0
  %1222 = vmatpush1.msra.mxu0 0.0
  %1223 = vmatprep.subr.mxu0 0.0
  %1224 = vmatpush1.msra.mxu0 0.0
  %1225 = vmatprep.subr.mxu0 0.0
  %1226 = vmatpush1.msra.mxu0 0.0
  %1227 = vmatprep.subr.mxu0 0.0
  %1228 = vmatpush1.msra.mxu0 0.0
  %1229 = vmatprep.subr.mxu0 0.0
  %1230 = vmatpush1.msra.mxu0 0.0
  %1231 = vmatprep.subr.mxu0 0.0
  %1232 = vmatpush1.msra.mxu0 0.0
  %1233 = vmatprep.subr.mxu0 0.0
  %1234 = vmatpush1.msra.mxu0 0.0
  %1235 = vmatprep.subr.mxu0 0.0
  %1236 = vmatpush1.msra.mxu0 0.0
  %1237 = vmatprep.subr.mxu0 0.0
  %1238 = vmatpush1.msra.mxu0 0.0
  %1239 = vmatprep.subr.mxu0 0.0
  %1240 = vmatpush1.msra.mxu0 0.0
  %1241 = vmatprep.subr.mxu0 0.0
  %1242 = vmatpush1.msra.mxu0 0.0
  %1243 = vmatprep.subr.mxu0 0.0
  %1244 = vmatpush1.msra.mxu0 0.0
  %1245 = vmatprep.subr.mxu0 0.0
  %1246 = vmatpush1.msra.mxu0 0.0
  %1247 = vmatprep.subr.mxu0 0.0
  %1248 = vmatpush1.msra.mxu0 0.0
  %1249 = vmatprep.subr.mxu0 0.0
  %1250 = vmatpush1.msra.mxu0 0.0
  %1251 = vmatprep.subr.mxu0 0.0
  %1252 = vmatpush1.msra.mxu0 0.0
  %1253 = vmatprep.mubr.f32.mxu0 0.0
  %1254 = vmatmul.mubr.f32.gmra.mrb[0].mxu0 %v1178
  %v1255 = vpop.f32.mrb[0].mxu0
  %v1256 = vadd.f32 0.0, %v1255
  %v1257 = vpop.f32.mrb[0].mxu0
  %1258 = vmatprep.mubr.f32.mxu0 0.0
  %1259 = vmatmul.mubr.f32.gmra.mrb[0].mxu0 %v1181
  %v1260 = vpop.f32.mrb[0].mxu0
  %v1261 = vadd.f32 0.0, %v1260
  %v1262 = vpop.f32.mrb[0].mxu0
  %1263 = vmatprep.mubr.f32.mxu0 0.0
  %1264 = vmatmul.mubr.f32.gmra.mrb[0].mxu0 %v1184
  %v1265 = vpop.f32.mrb[0].mxu0
  %v1266 = vadd.f32 0.0, %v1265
  %v1267 = vpop.f32.mrb[0].mxu0
  %1268 = vmatprep.mubr.f32.mxu0 0.0
  %1269 = vmatmul.mubr.f32.gmra.mrb[0].mxu0 %v1187
  %v1270 = vpop.f32.mrb[0].mxu0
  %v1271 = vadd.f32 0.0, %v1270
  %v1272 = vpop.f32.mrb[0].mxu0
  %1273 = vdwg.mxu0
  %1278 = vrot.lane.b32.xlu0 %v1256, 64
  %v1279 = vpop.permute.xlu0 %1278
  %1280 = vrot.lane.b32.xlu0 %v1261, 64
  %v1281 = vpop.permute.xlu0 %1280
  %1282 = vrot.lane.b32.xlu0 %v1266, 64
  %v1283 = vpop.permute.xlu0 %1282
  %1284 = vrot.lane.b32.xlu0 %v1271, 64
  %v1285 = vpop.permute.xlu0 %1284
  %1290 = vxpose.xlu0.b32.start [1/16] %v1279, 128
  %1291 = vxpose.xlu0.b32.cont [2/16] %v1281, 128
  %1292 = vxpose.xlu0.b32.cont [3/16] %v1283, 128
  %1293 = vxpose.xlu0.b32.cont [4/16] %v1285, 128
  %1294 = vxpose.xlu0.b32.cont [5/16] 0.0, 128
  %1295 = vxpose.xlu0.b32.cont [6/16] 0.0, 128
  %1296 = vxpose.xlu0.b32.cont [7/16] 0.0, 128
  %1297 = vxpose.xlu0.b32.cont [8/16] 0.0, 128
  %1298 = vxpose.xlu0.b32.cont [9/16] 0.0, 128
  %1299 = vxpose.xlu0.b32.cont [10/16] 0.0, 128
  %1300 = vxpose.xlu0.b32.cont [11/16] 0.0, 128
  %1301 = vxpose.xlu0.b32.cont [12/16] 0.0, 128
  %1302 = vxpose.xlu0.b32.cont [13/16] 0.0, 128
  %1303 = vxpose.xlu0.b32.cont [14/16] 0.0, 128
  %1304 = vxpose.xlu0.b32.cont [15/16] 0.0, 128
  %1305 = vxpose.xlu0.b32.end [16/16] 0.0, 128
  %v1306 = vpop.trf.xlu0
  %v1307 = vpop.trf.xlu0
  %v1308 = vpop.trf.xlu0
  %v1309 = vpop.trf.xlu0
  %v1310 = vpop.trf.xlu0
  %v1311 = vpop.trf.xlu0
  %v1312 = vpop.trf.xlu0
  %v1313 = vpop.trf.xlu0
  %v1314 = vpop.trf.xlu0
  %v1315 = vpop.trf.xlu0
  %v1316 = vpop.trf.xlu0
  %v1317 = vpop.trf.xlu0
  %v1318 = vpop.trf.xlu0
  %v1319 = vpop.trf.xlu0
  %v1320 = vpop.trf.xlu0
  %v1321 = vpop.trf.xlu0
  %v1322 = vlaneseq
  %v1323 = vshrl.u32 %v1322, 7
  %v1324 = vsub.s32 0, %v1323
  %v1325 = vrot.slane %v1306, %v1324
  %1327 = vbcast.lane.b32.xlu0 %v1325, 256
  %v1328 = vpop.permute.xlu0 %1327
  %s1330 = sor.u32 256, 8
  %1331 = vbcast.lane.b32.xlu0 %v1325, %s1330
  %v1332 = vpop.permute.xlu0 %1331
  %s1334 = sor.u32 256, 16
  %1335 = vbcast.lane.b32.xlu0 %v1325, %s1334
  %v1336 = vpop.permute.xlu0 %1335
  %s1338 = sor.u32 256, 24
  %1339 = vbcast.lane.b32.xlu0 %v1325, %s1338
  %v1340 = vpop.permute.xlu0 %1339
  %v1341 = vlaneseq
  %v1342 = vshrl.u32 %v1341, 7
  %v1343 = vsub.s32 1, %v1342
  %v1344 = vrot.slane %v1306, %v1343
  %1346 = vbcast.lane.b32.xlu0 %v1344, 256
  %v1347 = vpop.permute.xlu0 %1346
  %s1349 = sor.u32 256, 8
  %1350 = vbcast.lane.b32.xlu0 %v1344, %s1349
  %v1351 = vpop.permute.xlu0 %1350
  %s1353 = sor.u32 256, 16
  %1354 = vbcast.lane.b32.xlu0 %v1344, %s1353
  %v1355 = vpop.permute.xlu0 %1354
  %s1357 = sor.u32 256, 24
  %1358 = vbcast.lane.b32.xlu0 %v1344, %s1357
  %v1359 = vpop.permute.xlu0 %1358
  %v1360 = vlaneseq
  %v1361 = vshrl.u32 %v1360, 7
  %v1362 = vsub.s32 2, %v1361
  %v1363 = vrot.slane %v1306, %v1362
  %1365 = vbcast.lane.b32.xlu0 %v1363, 256
  %v1366 = vpop.permute.xlu0 %1365
  %s1368 = sor.u32 256, 8
  %1369 = vbcast.lane.b32.xlu0 %v1363, %s1368
  %v1370 = vpop.permute.xlu0 %1369
  %s1372 = sor.u32 256, 16
  %1373 = vbcast.lane.b32.xlu0 %v1363, %s1372
  %v1374 = vpop.permute.xlu0 %1373
  %s1376 = sor.u32 256, 24
  %1377 = vbcast.lane.b32.xlu0 %v1363, %s1376
  %v1378 = vpop.permute.xlu0 %1377
  %v1379 = vlaneseq
  %v1380 = vshrl.u32 %v1379, 7
  %v1381 = vsub.s32 3, %v1380
  %v1382 = vrot.slane %v1306, %v1381
  %1384 = vbcast.lane.b32.xlu0 %v1382, 256
  %v1385 = vpop.permute.xlu0 %1384
  %s1387 = sor.u32 256, 8
  %1388 = vbcast.lane.b32.xlu0 %v1382, %s1387
  %v1389 = vpop.permute.xlu0 %1388
  %s1391 = sor.u32 256, 16
  %1392 = vbcast.lane.b32.xlu0 %v1382, %s1391
  %v1393 = vpop.permute.xlu0 %1392
  %s1395 = sor.u32 256, 24
  %1396 = vbcast.lane.b32.xlu0 %v1382, %s1395
  %v1397 = vpop.permute.xlu0 %1396
  %v1398 = vlaneseq
  %v1399 = vshrl.u32 %v1398, 7
  %v1400 = vsub.s32 4, %v1399
  %v1401 = vrot.slane %v1306, %v1400
  %1403 = vbcast.lane.b32.xlu0 %v1401, 256
  %v1404 = vpop.permute.xlu0 %1403
  %s1406 = sor.u32 256, 8
  %1407 = vbcast.lane.b32.xlu0 %v1401, %s1406
  %v1408 = vpop.permute.xlu0 %1407
  %s1410 = sor.u32 256, 16
  %1411 = vbcast.lane.b32.xlu0 %v1401, %s1410
  %v1412 = vpop.permute.xlu0 %1411
  %s1414 = sor.u32 256, 24
  %1415 = vbcast.lane.b32.xlu0 %v1401, %s1414
  %v1416 = vpop.permute.xlu0 %1415
  %v1417 = vlaneseq
  %v1418 = vshrl.u32 %v1417, 7
  %v1419 = vsub.s32 5, %v1418
  %v1420 = vrot.slane %v1306, %v1419
  %1422 = vbcast.lane.b32.xlu0 %v1420, 256
  %v1423 = vpop.permute.xlu0 %1422
  %s1425 = sor.u32 256, 8
  %1426 = vbcast.lane.b32.xlu0 %v1420, %s1425
  %v1427 = vpop.permute.xlu0 %1426
  %s1429 = sor.u32 256, 16
  %1430 = vbcast.lane.b32.xlu0 %v1420, %s1429
  %v1431 = vpop.permute.xlu0 %1430
  %s1433 = sor.u32 256, 24
  %1434 = vbcast.lane.b32.xlu0 %v1420, %s1433
  %v1435 = vpop.permute.xlu0 %1434
  %v1436 = vlaneseq
  %v1437 = vshrl.u32 %v1436, 7
  %v1438 = vsub.s32 6, %v1437
  %v1439 = vrot.slane %v1306, %v1438
  %1441 = vbcast.lane.b32.xlu0 %v1439, 256
  %v1442 = vpop.permute.xlu0 %1441
  %s1444 = sor.u32 256, 8
  %1445 = vbcast.lane.b32.xlu0 %v1439, %s1444
  %v1446 = vpop.permute.xlu0 %1445
  %s1448 = sor.u32 256, 16
  %1449 = vbcast.lane.b32.xlu0 %v1439, %s1448
  %v1450 = vpop.permute.xlu0 %1449
  %s1452 = sor.u32 256, 24
  %1453 = vbcast.lane.b32.xlu0 %v1439, %s1452
  %v1454 = vpop.permute.xlu0 %1453
  %v1455 = vlaneseq
  %v1456 = vshrl.u32 %v1455, 7
  %v1457 = vsub.s32 7, %v1456
  %v1458 = vrot.slane %v1306, %v1457
  %1460 = vbcast.lane.b32.xlu0 %v1458, 256
  %v1461 = vpop.permute.xlu0 %1460
  %s1463 = sor.u32 256, 8
  %1464 = vbcast.lane.b32.xlu0 %v1458, %s1463
  %v1465 = vpop.permute.xlu0 %1464
  %s1467 = sor.u32 256, 16
  %1468 = vbcast.lane.b32.xlu0 %v1458, %s1467
  %v1469 = vpop.permute.xlu0 %1468
  %s1471 = sor.u32 256, 24
  %1472 = vbcast.lane.b32.xlu0 %v1458, %s1471
  %v1473 = vpop.permute.xlu0 %1472
  %v1475 = vcombine.high %v1307, %v1307
  %v1477 = vunpack.c.l.s4 1966171168
  %v1478 = vunpack.c.0.s8 %v1477
  %v1479 = vlaneseq
  %v1480 = vshrl.u32 %v1479, 7
  %v1481 = vsub.s32 %v1478, %v1480
  %v1482 = vrot.slane %v1307, %v1481
  %v1484 = vunpack.c.l.s4 1966171168
  %v1485 = vunpack.c.0.s8 %v1484
  %v1486 = vlaneseq
  %v1487 = vshrl.u32 %v1486, 7
  %v1488 = vsub.s32 %v1485, %v1487
  %v1489 = vrot.slane %v1475, %v1488
  %v1490 = vcombine.high %v1482, %v1482
  %v1491 = vcombine.high %v1489, %v1489
  %v1493 = vunpack.c.l.s4 1966171168
  %v1494 = vunpack.c.0.s8 %v1493
  %v1495 = vlaneseq
  %v1496 = vshrl.u32 %v1495, 7
  %v1497 = vsub.s32 %v1494, %v1496
  %v1498 = vrot.slane %v1482, %v1497
  %v1500 = vunpack.c.l.s4 1966171168
  %v1501 = vunpack.c.0.s8 %v1500
  %v1502 = vlaneseq
  %v1503 = vshrl.u32 %v1502, 7
  %v1504 = vsub.s32 %v1501, %v1503
  %v1505 = vrot.slane %v1489, %v1504
  %v1507 = vunpack.c.l.s4 1966171168
  %v1508 = vunpack.c.0.s8 %v1507
  %v1509 = vlaneseq
  %v1510 = vshrl.u32 %v1509, 7
  %v1511 = vsub.s32 %v1508, %v1510
  %v1512 = vrot.slane %v1490, %v1511
  %v1514 = vunpack.c.l.s4 1966171168
  %v1515 = vunpack.c.0.s8 %v1514
  %v1516 = vlaneseq
  %v1517 = vshrl.u32 %v1516, 7
  %v1518 = vsub.s32 %v1515, %v1517
  %v1519 = vrot.slane %v1491, %v1518
  %v1520 = vcombine.high %v1498, %v1498
  %v1521 = vcombine.high %v1505, %v1505
  %v1522 = vcombine.high %v1512, %v1512
  %v1523 = vcombine.high %v1519, %v1519
  %v1524 = vlaneseq
  %v1525 = vshrl.u32 %v1524, 7
  %v1526 = vsub.s32 0, %v1525
  %v1527 = vrot.slane %v1498, %v1526
  %v1528 = vlaneseq
  %v1529 = vshrl.u32 %v1528, 7
  %v1530 = vsub.s32 0, %v1529
  %v1531 = vrot.slane %v1512, %v1530
  %v1532 = vlaneseq
  %v1533 = vshrl.u32 %v1532, 7
  %v1534 = vsub.s32 0, %v1533
  %v1535 = vrot.slane %v1520, %v1534
  %v1536 = vlaneseq
  %v1537 = vshrl.u32 %v1536, 7
  %v1538 = vsub.s32 0, %v1537
  %v1539 = vrot.slane %v1522, %v1538
  %v1540 = vlaneseq
  %v1541 = vshrl.u32 %v1540, 7
  %v1542 = vsub.s32 0, %v1541
  %v1543 = vrot.slane %v1505, %v1542
  %v1544 = vlaneseq
  %v1545 = vshrl.u32 %v1544, 7
  %v1546 = vsub.s32 0, %v1545
  %v1547 = vrot.slane %v1519, %v1546
  %v1548 = vlaneseq
  %v1549 = vshrl.u32 %v1548, 7
  %v1550 = vsub.s32 0, %v1549
  %v1551 = vrot.slane %v1521, %v1550
  %v1552 = vlaneseq
  %v1553 = vshrl.u32 %v1552, 7
  %v1554 = vsub.s32 0, %v1553
  %v1555 = vrot.slane %v1523, %v1554
  %v1564 = vadd.f32 %v1328, %v1527
  %v1565 = vadd.f32 %v1332, %v1527
  %v1566 = vadd.f32 %v1336, %v1527
  %v1567 = vadd.f32 %v1340, %v1527
  %v1568 = vadd.f32 %v1347, %v1531
  %v1569 = vadd.f32 %v1351, %v1531
  %v1570 = vadd.f32 %v1355, %v1531
  %v1571 = vadd.f32 %v1359, %v1531
  %v1572 = vadd.f32 %v1366, %v1535
  %v1573 = vadd.f32 %v1370, %v1535
  %v1574 = vadd.f32 %v1374, %v1535
  %v1575 = vadd.f32 %v1378, %v1535
  %v1576 = vadd.f32 %v1385, %v1539
  %v1577 = vadd.f32 %v1389, %v1539
  %v1578 = vadd.f32 %v1393, %v1539
  %v1579 = vadd.f32 %v1397, %v1539
  %v1580 = vadd.f32 %v1404, %v1543
  %v1581 = vadd.f32 %v1408, %v1543
  %v1582 = vadd.f32 %v1412, %v1543
  %v1583 = vadd.f32 %v1416, %v1543
  %v1584 = vadd.f32 %v1423, %v1547
  %v1585 = vadd.f32 %v1427, %v1547
  %v1586 = vadd.f32 %v1431, %v1547
  %v1587 = vadd.f32 %v1435, %v1547
  %v1588 = vadd.f32 %v1442, %v1551
  %v1589 = vadd.f32 %v1446, %v1551
  %v1590 = vadd.f32 %v1450, %v1551
  %v1591 = vadd.f32 %v1454, %v1551
  %v1592 = vadd.f32 %v1461, %v1555
  %v1593 = vadd.f32 %v1465, %v1555
  %v1594 = vadd.f32 %v1469, %v1555
  %v1595 = vadd.f32 %v1473, %v1555
  %v1596 = vmul.f32 %v1564, 0.2
  %v1597 = vmul.f32 %v1565, 0.2
  %v1598 = vmul.f32 %v1566, 0.2
  %v1599 = vmul.f32 %v1567, 0.2
  %v1600 = vmul.f32 %v1568, 0.2
  %v1601 = vmul.f32 %v1569, 0.2
  %v1602 = vmul.f32 %v1570, 0.2
  %v1603 = vmul.f32 %v1571, 0.2
  %v1604 = vmul.f32 %v1572, 0.2
  %v1605 = vmul.f32 %v1573, 0.2
  %v1606 = vmul.f32 %v1574, 0.2
  %v1607 = vmul.f32 %v1575, 0.2
  %v1608 = vmul.f32 %v1576, 0.2
  %v1609 = vmul.f32 %v1577, 0.2
  %v1610 = vmul.f32 %v1578, 0.2
  %v1611 = vmul.f32 %v1579, 0.2
  %v1612 = vmul.f32 %v1580, 0.2
  %v1613 = vmul.f32 %v1581, 0.2
  %v1614 = vmul.f32 %v1582, 0.2
  %v1615 = vmul.f32 %v1583, 0.2
  %v1616 = vmul.f32 %v1584, 0.2
  %v1617 = vmul.f32 %v1585, 0.2
  %v1618 = vmul.f32 %v1586, 0.2
  %v1619 = vmul.f32 %v1587, 0.2
  %v1620 = vmul.f32 %v1588, 0.2
  %v1621 = vmul.f32 %v1589, 0.2
  %v1622 = vmul.f32 %v1590, 0.2
  %v1623 = vmul.f32 %v1591, 0.2
  %v1624 = vmul.f32 %v1592, 0.2
  %v1625 = vmul.f32 %v1593, 0.2
  %v1626 = vmul.f32 %v1594, 0.2
  %v1627 = vmul.f32 %v1595, 0.2
  %v1628 = vmax.f32 %v1564, %v1596
  %v1629 = vmax.f32 %v1565, %v1597
  %v1630 = vmax.f32 %v1566, %v1598
  %v1631 = vmax.f32 %v1567, %v1599
  %v1632 = vmax.f32 %v1568, %v1600
  %v1633 = vmax.f32 %v1569, %v1601
  %v1634 = vmax.f32 %v1570, %v1602
  %v1635 = vmax.f32 %v1571, %v1603
  %v1636 = vmax.f32 %v1572, %v1604
  %v1637 = vmax.f32 %v1573, %v1605
  %v1638 = vmax.f32 %v1574, %v1606
  %v1639 = vmax.f32 %v1575, %v1607
  %v1640 = vmax.f32 %v1576, %v1608
  %v1641 = vmax.f32 %v1577, %v1609
  %v1642 = vmax.f32 %v1578, %v1610
  %v1643 = vmax.f32 %v1579, %v1611
  %v1644 = vmax.f32 %v1580, %v1612
  %v1645 = vmax.f32 %v1581, %v1613
  %v1646 = vmax.f32 %v1582, %v1614
  %v1647 = vmax.f32 %v1583, %v1615
  %v1648 = vmax.f32 %v1584, %v1616
  %v1649 = vmax.f32 %v1585, %v1617
  %v1650 = vmax.f32 %v1586, %v1618
  %v1651 = vmax.f32 %v1587, %v1619
  %v1652 = vmax.f32 %v1588, %v1620
  %v1653 = vmax.f32 %v1589, %v1621
  %v1654 = vmax.f32 %v1590, %v1622
  %v1655 = vmax.f32 %v1591, %v1623
  %v1656 = vmax.f32 %v1592, %v1624
  %v1657 = vmax.f32 %v1593, %v1625
  %v1658 = vmax.f32 %v1594, %v1626
  %v1659 = vmax.f32 %v1595, %v1627
  %v1660 = vadd.f32 %v1628, %v33
  %v1661 = vadd.f32 %v1629, %v34
  %v1662 = vadd.f32 %v1630, %v35
  %v1663 = vadd.f32 %v1631, %v36
  %v1664 = vadd.f32 %v1632, %v33
  %v1665 = vadd.f32 %v1633, %v34
  %v1666 = vadd.f32 %v1634, %v35
  %v1667 = vadd.f32 %v1635, %v36
  %v1668 = vadd.f32 %v1636, %v33
  %v1669 = vadd.f32 %v1637, %v34
  %v1670 = vadd.f32 %v1638, %v35
  %v1671 = vadd.f32 %v1639, %v36
  %v1672 = vadd.f32 %v1640, %v33
  %v1673 = vadd.f32 %v1641, %v34
  %v1674 = vadd.f32 %v1642, %v35
  %v1675 = vadd.f32 %v1643, %v36
  %v1676 = vadd.f32 %v1644, %v33
  %v1677 = vadd.f32 %v1645, %v34
  %v1678 = vadd.f32 %v1646, %v35
  %v1679 = vadd.f32 %v1647, %v36
  %v1680 = vadd.f32 %v1648, %v33
  %v1681 = vadd.f32 %v1649, %v34
  %v1682 = vadd.f32 %v1650, %v35
  %v1683 = vadd.f32 %v1651, %v36
  %v1684 = vadd.f32 %v1652, %v33
  %v1685 = vadd.f32 %v1653, %v34
  %v1686 = vadd.f32 %v1654, %v35
  %v1687 = vadd.f32 %v1655, %v36
  %v1688 = vadd.f32 %v1656, %v33
  %v1689 = vadd.f32 %v1657, %v34
  %v1690 = vadd.f32 %v1658, %v35
  %v1691 = vadd.f32 %v1659, %v36
  %v1692 = vsel %vm561, %v1660, -inf
  %v1693 = vsel %vm561, %v1661, -inf
  %v1694 = vmax.f32 %v1692, %v1693
  %v1695 = vsel %vm561, %v1662, -inf
  %v1696 = vmax.f32 %v1694, %v1695
  %v1697 = vsel %vm561, %v1663, -inf
  %v1698 = vmax.f32 %v1696, %v1697
  %v1699 = vrot.slane %v1698, 4
  %v1700 = vmax.f32 %v1698, %v1699
  %v1701 = vrot.slane %v1700, 2
  %v1702 = vmax.f32 %v1700, %v1701
  %v1703 = vrot.slane %v1702, 1
  %v1704 = vmax.f32 %v1702, %v1703
  %v1705 = vsel %vm561, %v1664, -inf
  %v1706 = vsel %vm561, %v1665, -inf
  %v1707 = vmax.f32 %v1705, %v1706
  %v1708 = vsel %vm561, %v1666, -inf
  %v1709 = vmax.f32 %v1707, %v1708
  %v1710 = vsel %vm561, %v1667, -inf
  %v1711 = vmax.f32 %v1709, %v1710
  %v1712 = vrot.slane %v1711, 4
  %v1713 = vmax.f32 %v1711, %v1712
  %v1714 = vrot.slane %v1713, 2
  %v1715 = vmax.f32 %v1713, %v1714
  %v1716 = vrot.slane %v1715, 1
  %v1717 = vmax.f32 %v1715, %v1716
  %v1718 = vsel %vm561, %v1668, -inf
  %v1719 = vsel %vm561, %v1669, -inf
  %v1720 = vmax.f32 %v1718, %v1719
  %v1721 = vsel %vm561, %v1670, -inf
  %v1722 = vmax.f32 %v1720, %v1721
  %v1723 = vsel %vm561, %v1671, -inf
  %v1724 = vmax.f32 %v1722, %v1723
  %v1725 = vrot.slane %v1724, 4
  %v1726 = vmax.f32 %v1724, %v1725
  %v1727 = vrot.slane %v1726, 2
  %v1728 = vmax.f32 %v1726, %v1727
  %v1729 = vrot.slane %v1728, 1
  %v1730 = vmax.f32 %v1728, %v1729
  %v1731 = vsel %vm561, %v1672, -inf
  %v1732 = vsel %vm561, %v1673, -inf
  %v1733 = vmax.f32 %v1731, %v1732
  %v1734 = vsel %vm561, %v1674, -inf
  %v1735 = vmax.f32 %v1733, %v1734
  %v1736 = vsel %vm561, %v1675, -inf
  %v1737 = vmax.f32 %v1735, %v1736
  %v1738 = vrot.slane %v1737, 4
  %v1739 = vmax.f32 %v1737, %v1738
  %v1740 = vrot.slane %v1739, 2
  %v1741 = vmax.f32 %v1739, %v1740
  %v1742 = vrot.slane %v1741, 1
  %v1743 = vmax.f32 %v1741, %v1742
  %v1744 = vsel %vm561, %v1676, -inf
  %v1745 = vsel %vm561, %v1677, -inf
  %v1746 = vmax.f32 %v1744, %v1745
  %v1747 = vsel %vm561, %v1678, -inf
  %v1748 = vmax.f32 %v1746, %v1747
  %v1749 = vsel %vm561, %v1679, -inf
  %v1750 = vmax.f32 %v1748, %v1749
  %v1751 = vrot.slane %v1750, 4
  %v1752 = vmax.f32 %v1750, %v1751
  %v1753 = vrot.slane %v1752, 2
  %v1754 = vmax.f32 %v1752, %v1753
  %v1755 = vrot.slane %v1754, 1
  %v1756 = vmax.f32 %v1754, %v1755
  %v1757 = vsel %vm561, %v1680, -inf
  %v1758 = vsel %vm561, %v1681, -inf
  %v1759 = vmax.f32 %v1757, %v1758
  %v1760 = vsel %vm561, %v1682, -inf
  %v1761 = vmax.f32 %v1759, %v1760
  %v1762 = vsel %vm561, %v1683, -inf
  %v1763 = vmax.f32 %v1761, %v1762
  %v1764 = vrot.slane %v1763, 4
  %v1765 = vmax.f32 %v1763, %v1764
  %v1766 = vrot.slane %v1765, 2
  %v1767 = vmax.f32 %v1765, %v1766
  %v1768 = vrot.slane %v1767, 1
  %v1769 = vmax.f32 %v1767, %v1768
  %v1770 = vsel %vm561, %v1684, -inf
  %v1771 = vsel %vm561, %v1685, -inf
  %v1772 = vmax.f32 %v1770, %v1771
  %v1773 = vsel %vm561, %v1686, -inf
  %v1774 = vmax.f32 %v1772, %v1773
  %v1775 = vsel %vm561, %v1687, -inf
  %v1776 = vmax.f32 %v1774, %v1775
  %v1777 = vrot.slane %v1776, 4
  %v1778 = vmax.f32 %v1776, %v1777
  %v1779 = vrot.slane %v1778, 2
  %v1780 = vmax.f32 %v1778, %v1779
  %v1781 = vrot.slane %v1780, 1
  %v1782 = vmax.f32 %v1780, %v1781
  %v1783 = vsel %vm561, %v1688, -inf
  %v1784 = vsel %vm561, %v1689, -inf
  %v1785 = vmax.f32 %v1783, %v1784
  %v1786 = vsel %vm561, %v1690, -inf
  %v1787 = vmax.f32 %v1785, %v1786
  %v1788 = vsel %vm561, %v1691, -inf
  %v1789 = vmax.f32 %v1787, %v1788
  %v1790 = vrot.slane %v1789, 4
  %v1791 = vmax.f32 %v1789, %v1790
  %v1792 = vrot.slane %v1791, 2
  %v1793 = vmax.f32 %v1791, %v1792
  %v1794 = vrot.slane %v1793, 1
  %v1795 = vmax.f32 %v1793, %v1794
  %v1796 = vsub.f32 %v1660, %v1704
  %v1797 = vsub.f32 %v1661, %v1704
  %v1798 = vsub.f32 %v1662, %v1704
  %v1799 = vsub.f32 %v1663, %v1704
  %v1800 = vsub.f32 %v1664, %v1717
  %v1801 = vsub.f32 %v1665, %v1717
  %v1802 = vsub.f32 %v1666, %v1717
  %v1803 = vsub.f32 %v1667, %v1717
  %v1804 = vsub.f32 %v1668, %v1730
  %v1805 = vsub.f32 %v1669, %v1730
  %v1806 = vsub.f32 %v1670, %v1730
  %v1807 = vsub.f32 %v1671, %v1730
  %v1808 = vsub.f32 %v1672, %v1743
  %v1809 = vsub.f32 %v1673, %v1743
  %v1810 = vsub.f32 %v1674, %v1743
  %v1811 = vsub.f32 %v1675, %v1743
  %v1812 = vsub.f32 %v1676, %v1756
  %v1813 = vsub.f32 %v1677, %v1756
  %v1814 = vsub.f32 %v1678, %v1756
  %v1815 = vsub.f32 %v1679, %v1756
  %v1816 = vsub.f32 %v1680, %v1769
  %v1817 = vsub.f32 %v1681, %v1769
  %v1818 = vsub.f32 %v1682, %v1769
  %v1819 = vsub.f32 %v1683, %v1769
  %v1820 = vsub.f32 %v1684, %v1782
  %v1821 = vsub.f32 %v1685, %v1782
  %v1822 = vsub.f32 %v1686, %v1782
  %v1823 = vsub.f32 %v1687, %v1782
  %v1824 = vsub.f32 %v1688, %v1795
  %v1825 = vsub.f32 %v1689, %v1795
  %v1826 = vsub.f32 %v1690, %v1795
  %v1827 = vsub.f32 %v1691, %v1795
  %v1828 = vmul.f32 %v1796, 1.442695
  %v1829 = vpow.pop %v1828
  %v1830 = vmul.f32 %v1797, 1.442695
  %v1831 = vpow.pop %v1830
  %v1832 = vmul.f32 %v1798, 1.442695
  %v1833 = vpow.pop %v1832
  %v1834 = vmul.f32 %v1799, 1.442695
  %v1835 = vpow.pop %v1834
  %v1836 = vmul.f32 %v1800, 1.442695
  %v1837 = vpow.pop %v1836
  %v1838 = vmul.f32 %v1801, 1.442695
  %v1839 = vpow.pop %v1838
  %v1840 = vmul.f32 %v1802, 1.442695
  %v1841 = vpow.pop %v1840
  %v1842 = vmul.f32 %v1803, 1.442695
  %v1843 = vpow.pop %v1842
  %v1844 = vmul.f32 %v1804, 1.442695
  %v1845 = vpow.pop %v1844
  %v1846 = vmul.f32 %v1805, 1.442695
  %v1847 = vpow.pop %v1846
  %v1848 = vmul.f32 %v1806, 1.442695
  %v1849 = vpow.pop %v1848
  %v1850 = vmul.f32 %v1807, 1.442695
  %v1851 = vpow.pop %v1850
  %v1852 = vmul.f32 %v1808, 1.442695
  %v1853 = vpow.pop %v1852
  %v1854 = vmul.f32 %v1809, 1.442695
  %v1855 = vpow.pop %v1854
  %v1856 = vmul.f32 %v1810, 1.442695
  %v1857 = vpow.pop %v1856
  %v1858 = vmul.f32 %v1811, 1.442695
  %v1859 = vpow.pop %v1858
  %v1860 = vmul.f32 %v1812, 1.442695
  %v1861 = vpow.pop %v1860
  %v1862 = vmul.f32 %v1813, 1.442695
  %v1863 = vpow.pop %v1862
  %v1864 = vmul.f32 %v1814, 1.442695
  %v1865 = vpow.pop %v1864
  %v1866 = vmul.f32 %v1815, 1.442695
  %v1867 = vpow.pop %v1866
  %v1868 = vmul.f32 %v1816, 1.442695
  %v1869 = vpow.pop %v1868
  %v1870 = vmul.f32 %v1817, 1.442695
  %v1871 = vpow.pop %v1870
  %v1872 = vmul.f32 %v1818, 1.442695
  %v1873 = vpow.pop %v1872
  %v1874 = vmul.f32 %v1819, 1.442695
  %v1875 = vpow.pop %v1874
  %v1876 = vmul.f32 %v1820, 1.442695
  %v1877 = vpow.pop %v1876
  %v1878 = vmul.f32 %v1821, 1.442695
  %v1879 = vpow.pop %v1878
  %v1880 = vmul.f32 %v1822, 1.442695
  %v1881 = vpow.pop %v1880
  %v1882 = vmul.f32 %v1823, 1.442695
  %v1883 = vpow.pop %v1882
  %v1884 = vmul.f32 %v1824, 1.442695
  %v1885 = vpow.pop %v1884
  %v1886 = vmul.f32 %v1825, 1.442695
  %v1887 = vpow.pop %v1886
  %v1888 = vmul.f32 %v1826, 1.442695
  %v1889 = vpow.pop %v1888
  %v1890 = vmul.f32 %v1827, 1.442695
  %v1891 = vpow.pop %v1890
  %v1892 = vsel %vm561, %v1829, 0.0
  %v1893 = vsel %vm561, %v1831, 0.0
  %v1894 = vadd.f32 %v1892, %v1893
  %v1895 = vsel %vm561, %v1833, 0.0
  %v1896 = vadd.f32 %v1894, %v1895
  %v1897 = vsel %vm561, %v1835, 0.0
  %v1898 = vadd.f32 %v1896, %v1897
  %v1899 = vrot.slane %v1898, 4
  %v1900 = vadd.f32 %v1898, %v1899
  %v1901 = vrot.slane %v1900, 2
  %v1902 = vadd.f32 %v1900, %v1901
  %v1903 = vrot.slane %v1902, 1
  %v1904 = vadd.f32 %v1902, %v1903
  %v1905 = vsel %vm561, %v1837, 0.0
  %v1906 = vsel %vm561, %v1839, 0.0
  %v1907 = vadd.f32 %v1905, %v1906
  %v1908 = vsel %vm561, %v1841, 0.0
  %v1909 = vadd.f32 %v1907, %v1908
  %v1910 = vsel %vm561, %v1843, 0.0
  %v1911 = vadd.f32 %v1909, %v1910
  %v1912 = vrot.slane %v1911, 4
  %v1913 = vadd.f32 %v1911, %v1912
  %v1914 = vrot.slane %v1913, 2
  %v1915 = vadd.f32 %v1913, %v1914
  %v1916 = vrot.slane %v1915, 1
  %v1917 = vadd.f32 %v1915, %v1916
  %v1918 = vsel %vm561, %v1845, 0.0
  %v1919 = vsel %vm561, %v1847, 0.0
  %v1920 = vadd.f32 %v1918, %v1919
  %v1921 = vsel %vm561, %v1849, 0.0
  %v1922 = vadd.f32 %v1920, %v1921
  %v1923 = vsel %vm561, %v1851, 0.0
  %v1924 = vadd.f32 %v1922, %v1923
  %v1925 = vrot.slane %v1924, 4
  %v1926 = vadd.f32 %v1924, %v1925
  %v1927 = vrot.slane %v1926, 2
  %v1928 = vadd.f32 %v1926, %v1927
  %v1929 = vrot.slane %v1928, 1
  %v1930 = vadd.f32 %v1928, %v1929
  %v1931 = vsel %vm561, %v1853, 0.0
  %v1932 = vsel %vm561, %v1855, 0.0
  %v1933 = vadd.f32 %v1931, %v1932
  %v1934 = vsel %vm561, %v1857, 0.0
  %v1935 = vadd.f32 %v1933, %v1934
  %v1936 = vsel %vm561, %v1859, 0.0
  %v1937 = vadd.f32 %v1935, %v1936
  %v1938 = vrot.slane %v1937, 4
  %v1939 = vadd.f32 %v1937, %v1938
  %v1940 = vrot.slane %v1939, 2
  %v1941 = vadd.f32 %v1939, %v1940
  %v1942 = vrot.slane %v1941, 1
  %v1943 = vadd.f32 %v1941, %v1942
  %v1944 = vsel %vm561, %v1861, 0.0
  %v1945 = vsel %vm561, %v1863, 0.0
  %v1946 = vadd.f32 %v1944, %v1945
  %v1947 = vsel %vm561, %v1865, 0.0
  %v1948 = vadd.f32 %v1946, %v1947
  %v1949 = vsel %vm561, %v1867, 0.0
  %v1950 = vadd.f32 %v1948, %v1949
  %v1951 = vrot.slane %v1950, 4
  %v1952 = vadd.f32 %v1950, %v1951
  %v1953 = vrot.slane %v1952, 2
  %v1954 = vadd.f32 %v1952, %v1953
  %v1955 = vrot.slane %v1954, 1
  %v1956 = vadd.f32 %v1954, %v1955
  %v1957 = vsel %vm561, %v1869, 0.0
  %v1958 = vsel %vm561, %v1871, 0.0
  %v1959 = vadd.f32 %v1957, %v1958
  %v1960 = vsel %vm561, %v1873, 0.0
  %v1961 = vadd.f32 %v1959, %v1960
  %v1962 = vsel %vm561, %v1875, 0.0
  %v1963 = vadd.f32 %v1961, %v1962
  %v1964 = vrot.slane %v1963, 4
  %v1965 = vadd.f32 %v1963, %v1964
  %v1966 = vrot.slane %v1965, 2
  %v1967 = vadd.f32 %v1965, %v1966
  %v1968 = vrot.slane %v1967, 1
  %v1969 = vadd.f32 %v1967, %v1968
  %v1970 = vsel %vm561, %v1877, 0.0
  %v1971 = vsel %vm561, %v1879, 0.0
  %v1972 = vadd.f32 %v1970, %v1971
  %v1973 = vsel %vm561, %v1881, 0.0
  %v1974 = vadd.f32 %v1972, %v1973
  %v1975 = vsel %vm561, %v1883, 0.0
  %v1976 = vadd.f32 %v1974, %v1975
  %v1977 = vrot.slane %v1976, 4
  %v1978 = vadd.f32 %v1976, %v1977
  %v1979 = vrot.slane %v1978, 2
  %v1980 = vadd.f32 %v1978, %v1979
  %v1981 = vrot.slane %v1980, 1
  %v1982 = vadd.f32 %v1980, %v1981
  %v1983 = vsel %vm561, %v1885, 0.0
  %v1984 = vsel %vm561, %v1887, 0.0
  %v1985 = vadd.f32 %v1983, %v1984
  %v1986 = vsel %vm561, %v1889, 0.0
  %v1987 = vadd.f32 %v1985, %v1986
  %v1988 = vsel %vm561, %v1891, 0.0
  %v1989 = vadd.f32 %v1987, %v1988
  %v1990 = vrot.slane %v1989, 4
  %v1991 = vadd.f32 %v1989, %v1990
  %v1992 = vrot.slane %v1991, 2
  %v1993 = vadd.f32 %v1991, %v1992
  %v1994 = vrot.slane %v1993, 1
  %v1995 = vadd.f32 %v1993, %v1994
  %v1996 = vrcp.pop %v1904
  %v1997 = vrcp.pop %v1917
  %v1998 = vrcp.pop %v1930
  %v1999 = vrcp.pop %v1943
  %v2000 = vrcp.pop %v1956
  %v2001 = vrcp.pop %v1969
  %v2002 = vrcp.pop %v1982
  %v2003 = vrcp.pop %v1995
  %v2004 = vmul.f32 %v1829, %v1996
  %v2005 = vmul.f32 %v1831, %v1996
  %v2006 = vmul.f32 %v1833, %v1996
  %v2007 = vmul.f32 %v1835, %v1996
  %v2008 = vmul.f32 %v1837, %v1997
  %v2009 = vmul.f32 %v1839, %v1997
  %v2010 = vmul.f32 %v1841, %v1997
  %v2011 = vmul.f32 %v1843, %v1997
  %v2012 = vmul.f32 %v1845, %v1998
  %v2013 = vmul.f32 %v1847, %v1998
  %v2014 = vmul.f32 %v1849, %v1998
  %v2015 = vmul.f32 %v1851, %v1998
  %v2016 = vmul.f32 %v1853, %v1999
  %v2017 = vmul.f32 %v1855, %v1999
  %v2018 = vmul.f32 %v1857, %v1999
  %v2019 = vmul.f32 %v1859, %v1999
  %v2020 = vmul.f32 %v1861, %v2000
  %v2021 = vmul.f32 %v1863, %v2000
  %v2022 = vmul.f32 %v1865, %v2000
  %v2023 = vmul.f32 %v1867, %v2000
  %v2024 = vmul.f32 %v1869, %v2001
  %v2025 = vmul.f32 %v1871, %v2001
  %v2026 = vmul.f32 %v1873, %v2001
  %v2027 = vmul.f32 %v1875, %v2001
  %v2028 = vmul.f32 %v1877, %v2002
  %v2029 = vmul.f32 %v1879, %v2002
  %v2030 = vmul.f32 %v1881, %v2002
  %v2031 = vmul.f32 %v1883, %v2002
  %v2032 = vmul.f32 %v1885, %v2003
  %v2033 = vmul.f32 %v1887, %v2003
  %v2034 = vmul.f32 %v1889, %v2003
  %v2035 = vmul.f32 %v1891, %v2003
  %v2036 = vmul.f32 %v1256, %v959
  %v2037 = vmul.f32 %v1261, %v959
  %v2038 = vmul.f32 %v1266, %v959
  %v2039 = vmul.f32 %v1271, %v959
  %v2040 = vmul.f32 %v1256, %v963
  %v2041 = vmul.f32 %v1261, %v963
  %v2042 = vmul.f32 %v1266, %v963
  %v2043 = vmul.f32 %v1271, %v963
  %v2044 = vmul.f32 %v1256, %v967
  %v2045 = vmul.f32 %v1261, %v967
  %v2046 = vmul.f32 %v1266, %v967
  %v2047 = vmul.f32 %v1271, %v967
  %v2048 = vmul.f32 %v1256, %v971
  %v2049 = vmul.f32 %v1261, %v971
  %v2050 = vmul.f32 %v1266, %v971
  %v2051 = vmul.f32 %v1271, %v971
  %v2052 = vmul.f32 %v1256, %v975
  %v2053 = vmul.f32 %v1261, %v975
  %v2054 = vmul.f32 %v1266, %v975
  %v2055 = vmul.f32 %v1271, %v975
  %v2056 = vmul.f32 %v1256, %v979
  %v2057 = vmul.f32 %v1261, %v979
  %v2058 = vmul.f32 %v1266, %v979
  %v2059 = vmul.f32 %v1271, %v979
  %v2060 = vmul.f32 %v1256, %v983
  %v2061 = vmul.f32 %v1261, %v983
  %v2062 = vmul.f32 %v1266, %v983
  %v2063 = vmul.f32 %v1271, %v983
  %v2064 = vmul.f32 %v1256, %v987
  %v2065 = vmul.f32 %v1261, %v987
  %v2066 = vmul.f32 %v1266, %v987
  %v2067 = vmul.f32 %v1271, %v987
  %2068 = vxpose.xlu0.b32.start [1/16] %v2004, 128
  %2069 = vxpose.xlu0.b32.cont [2/16] %v2005, 128
  %2070 = vxpose.xlu0.b32.cont [3/16] %v2006, 128
  %2071 = vxpose.xlu0.b32.cont [4/16] %v2007, 128
  %2072 = vxpose.xlu0.b32.cont [5/16] %v2008, 128
  %2073 = vxpose.xlu0.b32.cont [6/16] %v2009, 128
  %2074 = vxpose.xlu0.b32.cont [7/16] %v2010, 128
  %2075 = vxpose.xlu0.b32.cont [8/16] %v2011, 128
  %2076 = vxpose.xlu0.b32.cont [9/16] %v2012, 128
  %2077 = vxpose.xlu0.b32.cont [10/16] %v2013, 128
  %2078 = vxpose.xlu0.b32.cont [11/16] %v2014, 128
  %2079 = vxpose.xlu0.b32.cont [12/16] %v2015, 128
  %2080 = vxpose.xlu0.b32.cont [13/16] %v2016, 128
  %2081 = vxpose.xlu0.b32.cont [14/16] %v2017, 128
  %2082 = vxpose.xlu0.b32.cont [15/16] %v2018, 128
  %2083 = vxpose.xlu0.b32.end [16/16] %v2019, 128
  %v2084 = vpop.trf.xlu0
  %v2085 = vpop.trf.xlu0
  %v2086 = vpop.trf.xlu0
  %v2087 = vpop.trf.xlu0
  %v2088 = vpop.trf.xlu0
  %v2089 = vpop.trf.xlu0
  %v2090 = vpop.trf.xlu0
  %v2091 = vpop.trf.xlu0
  %v2092 = vpop.trf.xlu0
  %v2093 = vpop.trf.xlu0
  %v2094 = vpop.trf.xlu0
  %v2095 = vpop.trf.xlu0
  %v2096 = vpop.trf.xlu0
  %v2097 = vpop.trf.xlu0
  %v2098 = vpop.trf.xlu0
  %v2099 = vpop.trf.xlu0
  %2100 = vxpose.xlu0.b32.start [1/16] %v2020, 128
  %2101 = vxpose.xlu0.b32.cont [2/16] %v2021, 128
  %2102 = vxpose.xlu0.b32.cont [3/16] %v2022, 128
  %2103 = vxpose.xlu0.b32.cont [4/16] %v2023, 128
  %2104 = vxpose.xlu0.b32.cont [5/16] %v2024, 128
  %2105 = vxpose.xlu0.b32.cont [6/16] %v2025, 128
  %2106 = vxpose.xlu0.b32.cont [7/16] %v2026, 128
  %2107 = vxpose.xlu0.b32.cont [8/16] %v2027, 128
  %2108 = vxpose.xlu0.b32.cont [9/16] %v2028, 128
  %2109 = vxpose.xlu0.b32.cont [10/16] %v2029, 128
  %2110 = vxpose.xlu0.b32.cont [11/16] %v2030, 128
  %2111 = vxpose.xlu0.b32.cont [12/16] %v2031, 128
  %2112 = vxpose.xlu0.b32.cont [13/16] %v2032, 128
  %2113 = vxpose.xlu0.b32.cont [14/16] %v2033, 128
  %2114 = vxpose.xlu0.b32.cont [15/16] %v2034, 128
  %2115 = vxpose.xlu0.b32.end [16/16] %v2035, 128
  %v2116 = vpop.trf.xlu0
  %v2117 = vpop.trf.xlu0
  %v2118 = vpop.trf.xlu0
  %v2119 = vpop.trf.xlu0
  %v2120 = vpop.trf.xlu0
  %v2121 = vpop.trf.xlu0
  %v2122 = vpop.trf.xlu0
  %v2123 = vpop.trf.xlu0
  %v2124 = vpop.trf.xlu0
  %v2125 = vpop.trf.xlu0
  %v2126 = vpop.trf.xlu0
  %v2127 = vpop.trf.xlu0
  %v2128 = vpop.trf.xlu0
  %v2129 = vpop.trf.xlu0
  %v2130 = vpop.trf.xlu0
  %v2131 = vpop.trf.xlu0
  %v2132 = vpack.c.bf16 %v2085, %v2084
  %v2133 = vpack.c.bf16 %v2117, %v2116
  %v2134 = vpack.c.bf16 %v2087, %v2086
  %v2135 = vpack.c.bf16 %v2119, %v2118
  %v2136 = vpack.c.bf16 %v2037, %v2036
  %v2137 = vpack.c.bf16 %v2039, %v2038
  %v2138 = vpack.c.bf16 %v2041, %v2040
  %v2139 = vpack.c.bf16 %v2043, %v2042
  %v2140 = vpack.c.bf16 %v2045, %v2044
  %v2141 = vpack.c.bf16 %v2047, %v2046
  %v2142 = vpack.c.bf16 %v2049, %v2048
  %v2143 = vpack.c.bf16 %v2051, %v2050
  %v2144 = vpack.c.bf16 %v2053, %v2052
  %v2145 = vpack.c.bf16 %v2055, %v2054
  %v2146 = vpack.c.bf16 %v2057, %v2056
  %v2147 = vpack.c.bf16 %v2059, %v2058
  %v2148 = vpack.c.bf16 %v2061, %v2060
  %v2149 = vpack.c.bf16 %v2063, %v2062
  %v2150 = vpack.c.bf16 %v2065, %v2064
  %v2151 = vpack.c.bf16 %v2067, %v2066
  %v2153 = vlaneseq
  %v2154 = vshrl.u32 %v2153, 7
  %v2155 = vsub.s32 0, %v2154
  %v2156 = vrot.slane %v1175, %v2155
  %2158 = vmatprep.subr.bf16.mxu0 0
  %2159 = vmatpush1.bf16.msra.mxu0 %v2136
  %2160 = vmatprep.subr.bf16.mxu0 0
  %2161 = vmatpush1.bf16.msra.mxu0 %v2137
  %2162 = vmatprep.subr.bf16.mxu0 0
  %2163 = vmatpush1.bf16.msra.mxu0 %v2138
  %2164 = vmatprep.subr.bf16.mxu0 0
  %2165 = vmatpush1.bf16.msra.mxu0 %v2139
  %2166 = vmatprep.subr.bf16.mxu0 0
  %2167 = vmatpush1.bf16.msra.mxu0 %v2140
  %2168 = vmatprep.subr.bf16.mxu0 0
  %2169 = vmatpush1.bf16.msra.mxu0 %v2141
  %2170 = vmatprep.subr.bf16.mxu0 0
  %2171 = vmatpush1.bf16.msra.mxu0 %v2142
  %2172 = vmatprep.subr.bf16.mxu0 0
  %2173 = vmatpush1.bf16.msra.mxu0 %v2143
  %2174 = vmatprep.subr.bf16.mxu0 0
  %2175 = vmatpush1.bf16.msra.mxu0 %v2144
  %2176 = vmatprep.subr.bf16.mxu0 0
  %2177 = vmatpush1.bf16.msra.mxu0 %v2145
  %2178 = vmatprep.subr.bf16.mxu0 0
  %2179 = vmatpush1.bf16.msra.mxu0 %v2146
  %2180 = vmatprep.subr.bf16.mxu0 0
  %2181 = vmatpush1.bf16.msra.mxu0 %v2147
  %2182 = vmatprep.subr.bf16.mxu0 0
  %2183 = vmatpush1.bf16.msra.mxu0 %v2148
  %2184 = vmatprep.subr.bf16.mxu0 0
  %2185 = vmatpush1.bf16.msra.mxu0 %v2149
  %2186 = vmatprep.subr.bf16.mxu0 0
  %2187 = vmatpush1.bf16.msra.mxu0 %v2150
  %2188 = vmatprep.subr.bf16.mxu0 0
  %2189 = vmatpush1.bf16.msra.mxu0 %v2151
  %2190 = vmatprep.mubr.bf16.mxu0 %v2133
  %2191 = vmatmul.mubr.bf16.gmra.mrb[0].mxu0 %v2132
  %v2192 = vpop.f32.mrb[0].mxu0
  %v2193 = vadd.f32 %v2156, %v2192
  %v2194 = vpop.f32.mrb[0].mxu0
  %v2195 = vpop.f32.mrb[0].mxu0
  %v2196 = vadd.f32 %v2156, %v2195
  %v2197 = vpop.f32.mrb[0].mxu0
  %2198 = vmatprep.mubr.bf16.mxu0 %v2135
  %2199 = vmatmul.mubr.bf16.gmra.mrb[0].mxu0 %v2134
  %v2200 = vpop.f32.mrb[0].mxu0
  %v2201 = vadd.f32 %v2156, %v2200
  %v2202 = vpop.f32.mrb[0].mxu0
  %v2203 = vpop.f32.mrb[0].mxu0
  %v2204 = vadd.f32 %v2156, %v2203
  %v2205 = vpop.f32.mrb[0].mxu0
  %2206 = vdwg.mxu0
  %v2207 = vld [vmem:[%s7] sm:$0xff]
  %v2208 = vld [vmem:[%s7 + $0x8] sm:$0xff]
  %v2209 = vld [vmem:[%s7 + $0x10] sm:$0xff]
  %v2210 = vld [vmem:[%s7 + $0x18] sm:$0xff]
  %v2211 = vld [vmem:[%s7 + $0x20] sm:$0xff]
  %v2212 = vld [vmem:[%s7 + $0x28] sm:$0xff]
  %v2213 = vld [vmem:[%s7 + $0x30] sm:$0xff]
  %v2214 = vld [vmem:[%s7 + $0x38] sm:$0xff]
  %v2215 = vld [vmem:[%s7 + $0x40] sm:$0xff]
  %v2216 = vld [vmem:[%s7 + $0x48] sm:$0xff]
  %v2217 = vld [vmem:[%s7 + $0x50] sm:$0xff]
  %v2218 = vld [vmem:[%s7 + $0x58] sm:$0xff]
  %v2219 = vld [vmem:[%s7 + $0x60] sm:$0xff]
  %v2220 = vld [vmem:[%s7 + $0x68] sm:$0xff]
  %v2221 = vld [vmem:[%s7 + $0x70] sm:$0xff]
  %v2222 = vld [vmem:[%s7 + $0x78] sm:$0xff]
  %v2223 = vld [vmem:[%s8] sm:$0x1]
  %v2225 = vsel %vm1176, %v2193, 0
  %v2228 = vsel %vm1176, %v2196, 0
  %v2231 = vsel %vm1176, %v2201, 0
  %v2234 = vsel %vm1176, %v2204, 0
  %2236 = vmatprep.subr.mxu0 %v2208
  %2237 = vmatpush1.msra.mxu0 %v2207
  %2238 = vmatprep.subr.mxu0 %v2210
  %2239 = vmatpush1.msra.mxu0 %v2209
  %2240 = vmatprep.subr.mxu0 %v2212
  %2241 = vmatpush1.msra.mxu0 %v2211
  %2242 = vmatprep.subr.mxu0 %v2214
  %2243 = vmatpush1.msra.mxu0 %v2213
  %2244 = vmatprep.subr.mxu0 %v2216
  %2245 = vmatpush1.msra.mxu0 %v2215
  %2246 = vmatprep.subr.mxu0 %v2218
  %2247 = vmatpush1.msra.mxu0 %v2217
  %2248 = vmatprep.subr.mxu0 %v2220
  %2249 = vmatpush1.msra.mxu0 %v2219
  %2250 = vmatprep.subr.mxu0 %v2222
  %2251 = vmatpush1.msra.mxu0 %v2221
  %2252 = vmatprep.subr.mxu0 0.0
  %2253 = vmatpush1.msra.mxu0 0.0
  %2254 = vmatprep.subr.mxu0 0.0
  %2255 = vmatpush1.msra.mxu0 0.0
  %2256 = vmatprep.subr.mxu0 0.0
  %2257 = vmatpush1.msra.mxu0 0.0
  %2258 = vmatprep.subr.mxu0 0.0
  %2259 = vmatpush1.msra.mxu0 0.0
  %2260 = vmatprep.subr.mxu0 0.0
  %2261 = vmatpush1.msra.mxu0 0.0
  %2262 = vmatprep.subr.mxu0 0.0
  %2263 = vmatpush1.msra.mxu0 0.0
  %2264 = vmatprep.subr.mxu0 0.0
  %2265 = vmatpush1.msra.mxu0 0.0
  %2266 = vmatprep.subr.mxu0 0.0
  %2267 = vmatpush1.msra.mxu0 0.0
  %2268 = vmatprep.subr.mxu0 0.0
  %2269 = vmatpush1.msra.mxu0 0.0
  %2270 = vmatprep.subr.mxu0 0.0
  %2271 = vmatpush1.msra.mxu0 0.0
  %2272 = vmatprep.subr.mxu0 0.0
  %2273 = vmatpush1.msra.mxu0 0.0
  %2274 = vmatprep.subr.mxu0 0.0
  %2275 = vmatpush1.msra.mxu0 0.0
  %2276 = vmatprep.subr.mxu0 0.0
  %2277 = vmatpush1.msra.mxu0 0.0
  %2278 = vmatprep.subr.mxu0 0.0
  %2279 = vmatpush1.msra.mxu0 0.0
  %2280 = vmatprep.subr.mxu0 0.0
  %2281 = vmatpush1.msra.mxu0 0.0
  %2282 = vmatprep.subr.mxu0 0.0
  %2283 = vmatpush1.msra.mxu0 0.0
  %2284 = vmatprep.subr.mxu0 0.0
  %2285 = vmatpush1.msra.mxu0 0.0
  %2286 = vmatprep.subr.mxu0 0.0
  %2287 = vmatpush1.msra.mxu0 0.0
  %2288 = vmatprep.subr.mxu0 0.0
  %2289 = vmatpush1.msra.mxu0 0.0
  %2290 = vmatprep.subr.mxu0 0.0
  %2291 = vmatpush1.msra.mxu0 0.0
  %2292 = vmatprep.subr.mxu0 0.0
  %2293 = vmatpush1.msra.mxu0 0.0
  %2294 = vmatprep.subr.mxu0 0.0
  %2295 = vmatpush1.msra.mxu0 0.0
  %2296 = vmatprep.subr.mxu0 0.0
  %2297 = vmatpush1.msra.mxu0 0.0
  %2298 = vmatprep.subr.mxu0 0.0
  %2299 = vmatpush1.msra.mxu0 0.0
  %2300 = vmatprep.mubr.f32.mxu0 0.0
  %2301 = vmatmul.mubr.f32.gmra.mrb[0].mxu0 %v2225
  %v2302 = vpop.f32.mrb[0].mxu0
  %v2303 = vadd.f32 0.0, %v2302
  %v2304 = vpop.f32.mrb[0].mxu0
  %v2305 = vadd.f32 0.0, %v2304
  %2306 = vmatprep.mubr.f32.mxu0 0.0
  %2307 = vmatmul.mubr.f32.gmra.mrb[0].mxu0 %v2228
  %v2308 = vpop.f32.mrb[0].mxu0
  %v2309 = vadd.f32 0.0, %v2308
  %v2310 = vpop.f32.mrb[0].mxu0
  %v2311 = vadd.f32 0.0, %v2310
  %2312 = vmatprep.mubr.f32.mxu0 0.0
  %2313 = vmatmul.mubr.f32.gmra.mrb[0].mxu0 %v2231
  %v2314 = vpop.f32.mrb[0].mxu0
  %v2315 = vadd.f32 0.0, %v2314
  %v2316 = vpop.f32.mrb[0].mxu0
  %v2317 = vadd.f32 0.0, %v2316
  %2318 = vmatprep.mubr.f32.mxu0 0.0
  %2319 = vmatmul.mubr.f32.gmra.mrb[0].mxu0 %v2234
  %v2320 = vpop.f32.mrb[0].mxu0
  %v2321 = vadd.f32 0.0, %v2320
  %v2322 = vpop.f32.mrb[0].mxu0
  %v2323 = vadd.f32 0.0, %v2322
  %2324 = vdwg.mxu0
  %2325 = vxpose.xlu0.b32.start [1/16] %v2305, 128
  %2326 = vxpose.xlu0.b32.cont [2/16] %v2311, 128
  %2327 = vxpose.xlu0.b32.cont [3/16] %v2317, 128
  %2328 = vxpose.xlu0.b32.cont [4/16] %v2323, 128
  %2329 = vxpose.xlu0.b32.cont [5/16] 0.0, 128
  %2330 = vxpose.xlu0.b32.cont [6/16] 0.0, 128
  %2331 = vxpose.xlu0.b32.cont [7/16] 0.0, 128
  %2332 = vxpose.xlu0.b32.cont [8/16] 0.0, 128
  %2333 = vxpose.xlu0.b32.cont [9/16] 0.0, 128
  %2334 = vxpose.xlu0.b32.cont [10/16] 0.0, 128
  %2335 = vxpose.xlu0.b32.cont [11/16] 0.0, 128
  %2336 = vxpose.xlu0.b32.cont [12/16] 0.0, 128
  %2337 = vxpose.xlu0.b32.cont [13/16] 0.0, 128
  %2338 = vxpose.xlu0.b32.cont [14/16] 0.0, 128
  %2339 = vxpose.xlu0.b32.cont [15/16] 0.0, 128
  %2340 = vxpose.xlu0.b32.end [16/16] 0.0, 128
  %v2341 = vpop.trf.xlu0
  %v2342 = vpop.trf.xlu0
  %v2343 = vpop.trf.xlu0
  %v2344 = vpop.trf.xlu0
  %v2345 = vpop.trf.xlu0
  %v2346 = vpop.trf.xlu0
  %v2347 = vpop.trf.xlu0
  %v2348 = vpop.trf.xlu0
  %v2349 = vpop.trf.xlu0
  %v2350 = vpop.trf.xlu0
  %v2351 = vpop.trf.xlu0
  %v2352 = vpop.trf.xlu0
  %v2353 = vpop.trf.xlu0
  %v2354 = vpop.trf.xlu0
  %v2355 = vpop.trf.xlu0
  %v2356 = vpop.trf.xlu0
  %v2357 = vlaneseq
  %v2358 = vshrl.u32 %v2357, 7
  %v2359 = vsub.s32 0, %v2358
  %v2360 = vrot.slane %v2341, %v2359
  %2362 = vbcast.lane.b32.xlu0 %v2360, 256
  %v2363 = vpop.permute.xlu0 %2362
  %s2365 = sor.u32 256, 8
  %2366 = vbcast.lane.b32.xlu0 %v2360, %s2365
  %v2367 = vpop.permute.xlu0 %2366
  %s2369 = sor.u32 256, 16
  %2370 = vbcast.lane.b32.xlu0 %v2360, %s2369
  %v2371 = vpop.permute.xlu0 %2370
  %s2373 = sor.u32 256, 24
  %2374 = vbcast.lane.b32.xlu0 %v2360, %s2373
  %v2375 = vpop.permute.xlu0 %2374
  %v2376 = vlaneseq
  %v2377 = vshrl.u32 %v2376, 7
  %v2378 = vsub.s32 0, %v2377
  %v2379 = vrot.slane %v2342, %v2378
  %v2380 = vadd.f32 %v2363, %v2379
  %v2381 = vadd.f32 %v2367, %v2379
  %v2382 = vadd.f32 %v2371, %v2379
  %v2383 = vadd.f32 %v2375, %v2379
  %v2384 = vmul.f32 %v2380, 0.2
  %v2385 = vmul.f32 %v2381, 0.2
  %v2386 = vmul.f32 %v2382, 0.2
  %v2387 = vmul.f32 %v2383, 0.2
  %v2388 = vmax.f32 %v2380, %v2384
  %v2389 = vmax.f32 %v2381, %v2385
  %v2390 = vmax.f32 %v2382, %v2386
  %v2391 = vmax.f32 %v2383, %v2387
  %v2392 = vadd.f32 %v2388, %v33
  %v2393 = vadd.f32 %v2389, %v34
  %v2394 = vadd.f32 %v2390, %v35
  %v2395 = vadd.f32 %v2391, %v36
  %v2396 = vsel %vm561, %v2392, -inf
  %v2397 = vsel %vm561, %v2393, -inf
  %v2398 = vsel %vm561, %v2394, -inf
  %v2399 = vsel %vm561, %v2395, -inf
  %v2400 = vmax.f32 %v2396, %v2397
  %v2401 = vmax.f32 %v2398, %v2399
  %v2402 = vmax.f32 %v2400, %v2401
  %v2403 = vrot.slane %v2402, 4
  %v2404 = vmax.f32 %v2402, %v2403
  %v2405 = vrot.slane %v2404, 2
  %v2406 = vmax.f32 %v2404, %v2405
  %v2407 = vrot.slane %v2406, 1
  %v2408 = vmax.f32 %v2406, %v2407
  %v2409 = vsub.f32 %v2392, %v2408
  %v2410 = vsub.f32 %v2393, %v2408
  %v2411 = vsub.f32 %v2394, %v2408
  %v2412 = vsub.f32 %v2395, %v2408
  %v2413 = vmul.f32 %v2409, 1.442695
  %v2414 = vpow.pop %v2413
  %v2415 = vmul.f32 %v2410, 1.442695
  %v2416 = vpow.pop %v2415
  %v2417 = vmul.f32 %v2411, 1.442695
  %v2418 = vpow.pop %v2417
  %v2419 = vmul.f32 %v2412, 1.442695
  %v2420 = vpow.pop %v2419
  %v2421 = vsel %vm561, %v2414, 0.0
  %v2422 = vsel %vm561, %v2416, 0.0
  %v2423 = vadd.f32 %v2421, %v2422
  %v2424 = vsel %vm561, %v2418, 0.0
  %v2425 = vadd.f32 %v2423, %v2424
  %v2426 = vsel %vm561, %v2420, 0.0
  %v2427 = vadd.f32 %v2425, %v2426
  %v2428 = vrot.slane %v2427, 4
  %v2429 = vadd.f32 %v2427, %v2428
  %v2430 = vrot.slane %v2429, 2
  %v2431 = vadd.f32 %v2429, %v2430
  %v2432 = vrot.slane %v2431, 1
  %v2433 = vadd.f32 %v2431, %v2432
  %v2434 = vrcp.pop %v2433
  %v2435 = vmul.f32 %v2414, %v2434
  %v2436 = vmul.f32 %v2416, %v2434
  %v2437 = vmul.f32 %v2418, %v2434
  %v2438 = vmul.f32 %v2420, %v2434
  %2439 = vxpose.xlu0.b32.start [1/16] %v2435, 128
  %2440 = vxpose.xlu0.b32.cont [2/16] %v2436, 128
  %2441 = vxpose.xlu0.b32.cont [3/16] %v2437, 128
  %2442 = vxpose.xlu0.b32.cont [4/16] %v2438, 128
  %2443 = vxpose.xlu0.b32.cont [5/16] 0.0, 128
  %2444 = vxpose.xlu0.b32.cont [6/16] 0.0, 128
  %2445 = vxpose.xlu0.b32.cont [7/16] 0.0, 128
  %2446 = vxpose.xlu0.b32.cont [8/16] 0.0, 128
  %2447 = vxpose.xlu0.b32.cont [9/16] 0.0, 128
  %2448 = vxpose.xlu0.b32.cont [10/16] 0.0, 128
  %2449 = vxpose.xlu0.b32.cont [11/16] 0.0, 128
  %2450 = vxpose.xlu0.b32.cont [12/16] 0.0, 128
  %2451 = vxpose.xlu0.b32.cont [13/16] 0.0, 128
  %2452 = vxpose.xlu0.b32.cont [14/16] 0.0, 128
  %2453 = vxpose.xlu0.b32.cont [15/16] 0.0, 128
  %2454 = vxpose.xlu0.b32.end [16/16] 0.0, 128
  %v2455 = vpop.trf.xlu0
  %v2456 = vpop.trf.xlu0
  %v2457 = vpop.trf.xlu0
  %v2458 = vpop.trf.xlu0
  %v2459 = vpop.trf.xlu0
  %v2460 = vpop.trf.xlu0
  %v2461 = vpop.trf.xlu0
  %v2462 = vpop.trf.xlu0
  %v2463 = vpop.trf.xlu0
  %v2464 = vpop.trf.xlu0
  %v2465 = vpop.trf.xlu0
  %v2466 = vpop.trf.xlu0
  %v2467 = vpop.trf.xlu0
  %v2468 = vpop.trf.xlu0
  %v2469 = vpop.trf.xlu0
  %v2470 = vpop.trf.xlu0
  %v2471 = vpack.c.bf16 %v2456, %v2455
  %v2472 = vpack.c.bf16 %v2458, %v2457
  %v2473 = vpack.c.bf16 %v2309, %v2303
  %v2474 = vpack.c.bf16 %v2321, %v2315
  %v2476 = vlaneseq
  %v2477 = vshrl.u32 %v2476, 7
  %v2478 = vsub.s32 0, %v2477
  %v2479 = vrot.slane %v2223, %v2478
  %v2482 = vsel %vm561, %v2471, 0
  %v2485 = vsel %vm561, %v2472, 0
  %2487 = vmatprep.subr.bf16.mxu0 0
  %2488 = vmatpush1.bf16.msra.mxu0 %v2473
  %2489 = vmatprep.subr.bf16.mxu0 0
  %2490 = vmatpush1.bf16.msra.mxu0 %v2474
  %2491 = vmatprep.subr.bf16.mxu0 0
  %2492 = vmatpush1.bf16.msra.mxu0 0
  %2493 = vmatprep.subr.bf16.mxu0 0
  %2494 = vmatpush1.bf16.msra.mxu0 0
  %2495 = vmatprep.subr.bf16.mxu0 0
  %2496 = vmatpush1.bf16.msra.mxu0 0
  %2497 = vmatprep.subr.bf16.mxu0 0
  %2498 = vmatpush1.bf16.msra.mxu0 0
  %2499 = vmatprep.subr.bf16.mxu0 0
  %2500 = vmatpush1.bf16.msra.mxu0 0
  %2501 = vmatprep.subr.bf16.mxu0 0
  %2502 = vmatpush1.bf16.msra.mxu0 0
  %2503 = vmatprep.subr.bf16.mxu0 0
  %2504 = vmatpush1.bf16.msra.mxu0 0
  %2505 = vmatprep.subr.bf16.mxu0 0
  %2506 = vmatpush1.bf16.msra.mxu0 0
  %2507 = vmatprep.subr.bf16.mxu0 0
  %2508 = vmatpush1.bf16.msra.mxu0 0
  %2509 = vmatprep.subr.bf16.mxu0 0
  %2510 = vmatpush1.bf16.msra.mxu0 0
  %2511 = vmatprep.subr.bf16.mxu0 0
  %2512 = vmatpush1.bf16.msra.mxu0 0
  %2513 = vmatprep.subr.bf16.mxu0 0
  %2514 = vmatpush1.bf16.msra.mxu0 0
  %2515 = vmatprep.subr.bf16.mxu0 0
  %2516 = vmatpush1.bf16.msra.mxu0 0
  %2517 = vmatprep.subr.bf16.mxu0 0
  %2518 = vmatpush1.bf16.msra.mxu0 0
  %2519 = vmatprep.mubr.bf16.mxu0 0
  %2520 = vmatmul.mubr.bf16.gmra.mrb[0].mxu0 %v2482
  %v2521 = vpop.f32.mrb[0].mxu0
  %v2522 = vadd.f32 %v2479, %v2521
  %v2523 = vpop.f32.mrb[0].mxu0
  %v2524 = vpop.f32.mrb[0].mxu0
  %v2525 = vadd.f32 %v2479, %v2524
  %v2526 = vpop.f32.mrb[0].mxu0
  %2527 = vmatprep.mubr.bf16.mxu0 0
  %2528 = vmatmul.mubr.bf16.gmra.mrb[0].mxu0 %v2485
  %v2529 = vpop.f32.mrb[0].mxu0
  %v2530 = vadd.f32 %v2479, %v2529
  %v2531 = vpop.f32.mrb[0].mxu0
  %v2532 = vpop.f32.mrb[0].mxu0
  %v2533 = vadd.f32 %v2479, %v2532
  %v2534 = vpop.f32.mrb[0].mxu0
  %2535 = vdwg.mxu0
  %2536 = vmax.xlane.f32.xlu0 %v2522
  %v2537 = vpop.xlane.xlu0 %2536
  %2538 = vmax.xlane.f32.xlu0 %v2525
  %v2539 = vpop.xlane.xlu0 %2538
  %2540 = vmax.xlane.f32.xlu0 %v2530
  %v2541 = vpop.xlane.xlu0 %2540
  %2542 = vmax.xlane.f32.xlu0 %v2533
  %v2543 = vpop.xlane.xlu0 %2542
  %v2544 = vsub.f32 %v2522, %v2537
  %v2545 = vsub.f32 %v2525, %v2539
  %v2546 = vsub.f32 %v2530, %v2541
  %v2547 = vsub.f32 %v2533, %v2543
  %v2548 = vmul.f32 %v2544, 1.442695
  %v2549 = vpow.pop %v2548
  %v2550 = vmul.f32 %v2545, 1.442695
  %v2551 = vpow.pop %v2550
  %v2552 = vmul.f32 %v2546, 1.442695
  %v2553 = vpow.pop %v2552
  %v2554 = vmul.f32 %v2547, 1.442695
  %v2555 = vpow.pop %v2554
  %2556 = vadd.xlane.f32.xlu0 %v2549
  %v2557 = vpop.xlane.xlu0 %2556
  %2558 = vadd.xlane.f32.xlu0 %v2551
  %v2559 = vpop.xlane.xlu0 %2558
  %2560 = vadd.xlane.f32.xlu0 %v2553
  %v2561 = vpop.xlane.xlu0 %2560
  %2562 = vadd.xlane.f32.xlu0 %v2555
  %v2563 = vpop.xlane.xlu0 %2562
  %v2564 = vlog2.pop %v2557
  %v2565 = vmul.f32 %v2564, 0.6931472
  %v2566 = vlog2.pop %v2559
  %v2567 = vmul.f32 %v2566, 0.6931472
  %v2568 = vlog2.pop %v2561
  %v2569 = vmul.f32 %v2568, 0.6931472
  %v2570 = vlog2.pop %v2563
  %v2571 = vmul.f32 %v2570, 0.6931472
  %v2572 = vsub.f32 %v2544, %v2565
  %v2573 = vsub.f32 %v2545, %v2567
  %v2574 = vsub.f32 %v2546, %v2569
  %v2575 = vsub.f32 %v2547, %v2571
  %2576 = vst [vmem:[%s9] sm:$0xff] %v2572
  %2577 = vst [vmem:[%s9 + $0x8] sm:$0xff] %v2573
  %2578 = vst [vmem:[%s9 + $0x10] sm:$0xff] %v2574
  %2579 = vst [vmem:[%s9 + $0x18] sm:$0xff] %v2575
  // Predicated region
  $region38: #{gat_forward.1} parent=0 // pred_check
    _
  $region39: #{gat_forward.1} parent=0 // pred_check_branch
    %2581 = sbr.rel (0) target = $region41
  $region40: #{gat_forward.1} parent=0 // pred_region
    _
  $region41: #{gat_forward.1} parent=0 // pred_fallthru
    _
  // Predicated region
  $region42: #{gat_forward.1} parent=0 // pred_check
    _
  $region43: #{gat_forward.1} parent=0 // pred_check_branch
    %2583 = sbr.rel (0) target = $region45
  $region44: #{gat_forward.1} parent=0 // pred_region
    _
  $region45: #{gat_forward.1} parent=0 // pred_fallthru
    _

</llo_original>
